<compile_context>
chip_gen: v5e
topology: v5e:2x2
jax: 0.10.0
libtpu: 0.0.40
codegen_flags: <defaults>
</compile_context>

<pallas_src>
import jax
import jax.numpy as jnp
import numpy as np
from jax.experimental import pallas as pl
from jax.experimental.pallas import tpu as pltpu

# ---- model hyper-parameters (skip_channels=64 is forced by the hard-coded
#      nn.Linear(64, 128) in clf_net) ----
LAYERS = 3
STACKS = 2
IN_CHANNELS = 4
RES_CHANNELS = 16
SKIP_CHANNELS = 64
HIDDEN = 128

B = 2
T = 32                       # power of two -> cheap per-batch row mask
BT = B * T

DILATIONS = [2 ** l for _ in range(STACKS) for l in range(LAYERS)]  # [1,2,4,1,2,4]
NB = len(DILATIONS)
RECEPTIVE = sum(DILATIONS)          # 14
SKIP_SIZE = T - RECEPTIVE           # 18  (== output_size in the PyTorch code)
assert T & (T - 1) == 0, "T must be a power of two for the cheap row mask"

LANES = 128

# ---- packed weight-slab layout (row offsets; every section is 8-row aligned
#      so in-kernel views start on sublane-tile boundaries) ----
CW0_R = 0                               # causal conv tap0   (CIN, R)
CW1_R = 8                               # causal conv tap1   (CIN, R)
CB_R = 16                               # causal conv bias   (1, R)
BLK_R = 24                              # residual blocks start
BLK_STRIDE = 88                         # rows per residual block section
DCW0_O, DCW1_O, DCB_O = 0, 16, 32       # dilated conv tap0 / tap1 / bias
SKW_O, SKB_O = 40, 56                   # skip 1x1 conv weight / bias
RSW_O, RSB_O = 64, 80                   # res  1x1 conv weight / bias
L1W_R = BLK_R + NB * BLK_STRIDE         # Linear(64,128) weight (S, 128) -> 552
L1B_R = L1W_R + SKIP_CHANNELS           # Linear(64,128) bias            -> 616
L2W_R = L1B_R + 8                       # Linear(128,1) weight (1, 128)  -> 624
L2B_R = L2W_R + 8                       # Linear(128,1) bias (replicated)-> 632
SLAB_ROWS = L2B_R + 8                   # 640 rows x 128 lanes x f32 ~ 320 KiB


# ----------------------------- Pallas kernel --------------------------------
def wavenet_kernel(x_ref,                 # (BT, IN_CHANNELS)
                   w_ref,                 # (SLAB_ROWS, 128) packed weights
                   out_ref):              # (1, BT)  lane-dense output
    f32 = jnp.float32
    R = RES_CHANNELS
    S = SKIP_CHANNELS

    # Per-batch row position masks, built ONCE and reused by every shift.
    row_r = jax.lax.broadcasted_iota(jnp.int32, (BT, R), 0) & (T - 1)
    masks = {d: (row_r >= d).astype(f32) for d in (1, 2, 4)}
    row_in = jax.lax.broadcasted_iota(jnp.int32, (BT, IN_CHANNELS), 0) & (T - 1)
    mask_in = (row_in >= 1).astype(f32)

    def shifted(a, d, m):
        # a[r-d] for rows r >= d inside each length-T batch block; first d rows
        # of each block are zeroed (causal pad; kills circular / cross-batch
        # bleed from the roll).  roll on XLU, mask multiply on VPU.
        return pltpu.roll(a, shift=d, axis=0) * m

    x = x_ref[...]                                                  # (BT, CIN)

    # Causal conv (kernel 2): two split dots against the unfused taps.
    cw0 = w_ref[CW0_R:CW0_R + IN_CHANNELS, 0:R]
    cw1 = w_ref[CW1_R:CW1_R + IN_CHANNELS, 0:R]
    cb = w_ref[CB_R:CB_R + 1, 0:R]
    h = (jnp.dot(shifted(x, 1, mask_in), cw0, preferred_element_type=f32)
         + jnp.dot(x, cw1, preferred_element_type=f32) + cb)        # (BT, R)

    # Residual stack: valid region stays right-aligned inside each length-T
    # batch block; invalid rows are never read by later valid rows.
    skip_sum = jnp.zeros((BT, S), f32)
    for i, d in enumerate(DILATIONS):
        base = BLK_R + i * BLK_STRIDE
        w0 = w_ref[base + DCW0_O:base + DCW0_O + R, 0:R]
        w1 = w_ref[base + DCW1_O:base + DCW1_O + R, 0:R]
        db = w_ref[base + DCB_O:base + DCB_O + 1, 0:R]
        skw = w_ref[base + SKW_O:base + SKW_O + R, 0:S]
        skb = w_ref[base + SKB_O:base + SKB_O + 1, 0:S]
        rsw = w_ref[base + RSW_O:base + RSW_O + R, 0:R]
        rsb = w_ref[base + RSB_O:base + RSB_O + 1, 0:R]

        gates = jnp.maximum(
            jnp.dot(shifted(h, d, masks[d]), w0, preferred_element_type=f32)
            + jnp.dot(h, w1, preferred_element_type=f32) + db, 0.0)       # (BT, R)
        skip_sum = skip_sum + jnp.dot(gates, skw, preferred_element_type=f32) + skb
        h = jnp.dot(gates, rsw, preferred_element_type=f32) + rsb + h     # residual

    # clf_net: relu -> Linear(64,128) -> relu -> Linear(128,1)
    l1w = w_ref[L1W_R:L1W_R + S, 0:HIDDEN]
    l1b = w_ref[L1B_R:L1B_R + 1, 0:HIDDEN]
    l2w = w_ref[L2W_R:L2W_R + 1, 0:HIDDEN]
    l2b = w_ref[L2B_R:L2B_R + 1, 0:BT]          # scalar replicated across lanes

    o = jnp.maximum(skip_sum, 0.0)                                   # (BT, S)
    o = jnp.maximum(jnp.dot(o, l1w, preferred_element_type=f32) + l1b, 0.0)  # (BT, 128)
    # Lane-dense head: (1,128) x (BT,128)^T -> (1, BT) row in one store.
    head = jax.lax.dot_general(l2w, o, (((1,), (1,)), ((), ())),
                               preferred_element_type=f32)           # (1, BT)
    out_ref[...] = head + l2b


# ----------------------------- weight packing ---------------------------------
def pack_params(p):
    """Pack all weights once (host-side, outside the jitted hot path) into one
    lane-padded (SLAB_ROWS, 128) f32 slab with 8-row-aligned sections."""
    slab = np.zeros((SLAB_ROWS, LANES), np.float32)

    cw = np.asarray(p['causal_w'])                       # (R, CIN, 2)
    slab[CW0_R:CW0_R + IN_CHANNELS, :RES_CHANNELS] = cw[:, :, 0].T
    slab[CW1_R:CW1_R + IN_CHANNELS, :RES_CHANNELS] = cw[:, :, 1].T
    slab[CB_R, :RES_CHANNELS] = np.asarray(p['causal_b'])

    dcw = np.asarray(p['dc_w'])                          # (NB, R, R, 2)
    dcb = np.asarray(p['dc_b'])                          # (NB, R)
    sw = np.asarray(p['skip_w'])                         # (NB, S, R, 1)
    sb = np.asarray(p['skip_b'])                         # (NB, S)
    rw = np.asarray(p['res_w'])                          # (NB, R, R, 1)
    rb = np.asarray(p['res_b'])                          # (NB, R)
    for i in range(NB):
        base = BLK_R + i * BLK_STRIDE
        slab[base + DCW0_O:base + DCW0_O + RES_CHANNELS, :RES_CHANNELS] = dcw[i, :, :, 0].T
        slab[base + DCW1_O:base + DCW1_O + RES_CHANNELS, :RES_CHANNELS] = dcw[i, :, :, 1].T
        slab[base + DCB_O, :RES_CHANNELS] = dcb[i]
        slab[base + SKW_O:base + SKW_O + RES_CHANNELS, :SKIP_CHANNELS] = sw[i, :, :, 0].T
        slab[base + SKB_O, :SKIP_CHANNELS] = sb[i]
        slab[base + RSW_O:base + RSW_O + RES_CHANNELS, :RES_CHANNELS] = rw[i, :, :, 0].T
        slab[base + RSB_O, :RES_CHANNELS] = rb[i]

    slab[L1W_R:L1W_R + SKIP_CHANNELS, :HIDDEN] = np.asarray(p['l1_w']).T
    slab[L1B_R, :HIDDEN] = np.asarray(p['l1_b'])
    slab[L2W_R, :HIDDEN] = np.asarray(p['l2_w'])[0]
    slab[L2B_R, :] = float(np.asarray(p['l2_b'])[0])     # replicated across lanes
    return jnp.asarray(slab)


# ------------------------------- wrapper -------------------------------------
@jax.jit
def wavenet_pallas(x_ncw, w_slab):
    # NCW -> (B*T, CIN): batch folded into one tile, single grid-less call.
    x_flat = jnp.transpose(x_ncw, (0, 2, 1)).reshape(BT, IN_CHANNELS).astype(jnp.float32)

    out = pl.pallas_call(
        wavenet_kernel,
        out_shape=jax.ShapeDtypeStruct((1, BT), jnp.float32),
    )(x_flat, w_slab)

    # Per batch, only the last SKIP_SIZE rows are valid (right-aligned).
    return out.reshape(B, T, 1)[:, T - SKIP_SIZE:, :]


# --------------------------- pure-JAX reference -------------------------------
def _conv1d(x, w, b, dilation=1, padding=0):
    y = jax.lax.conv_general_dilated(
        x, w, window_strides=(1,), padding=[(padding, padding)],
        rhs_dilation=(dilation,), dimension_numbers=('NCH', 'OIH', 'NCH'))
    return y + b[None, :, None]


def wavenet_ref(x, p):
    h = _conv1d(x, p['causal_w'], p['causal_b'], padding=1)[:, :, :-1]   # CConv1d
    skips = []
    for i, d in enumerate(DILATIONS):
        dc = _conv1d(h, p['dc_w'][i], p['dc_b'][i], dilation=d)
        gates = jnp.maximum(dc, 0.0)
        o = _conv1d(gates, p['res_w'][i], p['res_b'][i])
        h = o + h[:, :, -o.shape[2]:]
        skip = _conv1d(gates, p['skip_w'][i], p['skip_b'][i])
        skips.append(skip[:, :, -SKIP_SIZE:])
    s = sum(skips)                                   # (B, S, SKIP_SIZE)
    o = jnp.maximum(s, 0.0)
    o = jnp.transpose(o, (0, 2, 1))                  # (B, SKIP_SIZE, S)
    o = jnp.maximum(o @ p['l1_w'].T + p['l1_b'], 0.0)
    o = o @ p['l2_w'].T + p['l2_b']
    return o


# ------------------------------ param init ------------------------------------
def init_params(key):
    def u(k, shape, fan_in):
        lim = 1.0 / np.sqrt(fan_in)
        return jax.random.uniform(k, shape, jnp.float32, -lim, lim)

    ks = iter(jax.random.split(key, 16))
    p = {}
    p['causal_w'] = u(next(ks), (RES_CHANNELS, IN_CHANNELS, 2), IN_CHANNELS * 2)
    p['causal_b'] = u(next(ks), (RES_CHANNELS,), IN_CHANNELS * 2)
    p['dc_w'] = u(next(ks), (NB, RES_CHANNELS, RES_CHANNELS, 2), RES_CHANNELS * 2)
    p['dc_b'] = u(next(ks), (NB, RES_CHANNELS), RES_CHANNELS * 2)
    p['res_w'] = u(next(ks), (NB, RES_CHANNELS, RES_CHANNELS, 1), RES_CHANNELS)
    p['res_b'] = u(next(ks), (NB, RES_CHANNELS), RES_CHANNELS)
    p['skip_w'] = u(next(ks), (NB, SKIP_CHANNELS, RES_CHANNELS, 1), RES_CHANNELS)
    p['skip_b'] = u(next(ks), (NB, SKIP_CHANNELS), RES_CHANNELS)
    p['l1_w'] = u(next(ks), (HIDDEN, SKIP_CHANNELS), SKIP_CHANNELS)
    p['l1_b'] = u(next(ks), (HIDDEN,), SKIP_CHANNELS)
    p['l2_w'] = u(next(ks), (1, HIDDEN), HIDDEN)
    p['l2_b'] = u(next(ks), (1,), HIDDEN)
    return p


if __name__ == "__main__":
    key = jax.random.PRNGKey(0)
    kx, kp = jax.random.split(key)
    x = jax.random.normal(kx, (B, IN_CHANNELS, T), jnp.float32)   # NCW, like PyTorch
    params = init_params(kp)

    # Weight packing happens exactly once, outside the per-call path.
    w_slab = pack_params(params)
    w_slab = jax.block_until_ready(w_slab)

    y = wavenet_pallas(x, w_slab)
    y = jax.block_until_ready(y)

    y_ref = wavenet_ref(x, params)
    assert y.shape == (B, SKIP_SIZE, 1), y.shape
    np.testing.assert_allclose(np.asarray(y), np.asarray(y_ref), rtol=1e-4, atol=1e-4)
    print("KERNEL_OK")
</pallas_src>

<mosaic_0001>
module attributes {stable_mosaic.version = 11 : i64} {
  func.func @wavenet_kernel(%arg0: memref<64x4xf32, #tpu.memory_space<vmem>>, %arg1: memref<640x128xf32, #tpu.memory_space<vmem>>, %arg2: memref<1x64xf32, #tpu.memory_space<vmem>>) attributes {dimension_semantics = [], scalar_prefetch = 0 : i64, scratch_operands = 0 : i64, tpu.core_type = #tpu.core_type<tc>} {
    %0 = tpu.iota {dimensions = array<i32: 0>} : vector<64x16xi32>
    %c31_i32 = arith.constant 31 : i32
    %1 = vector.broadcast %c31_i32 : i32 to vector<64x16xi32>
    %2 = arith.andi %0, %1 : vector<64x16xi32>
    %c1_i32 = arith.constant 1 : i32
    %3 = vector.broadcast %c1_i32 : i32 to vector<64x16xi32>
    %4 = arith.cmpi sge, %2, %3 : vector<64x16xi32>
    %5 = arith.extui %4 : vector<64x16xi1> to vector<64x16xi32>
    %6 = arith.sitofp %5 : vector<64x16xi32> to vector<64x16xf32>
    %c2_i32 = arith.constant 2 : i32
    %7 = vector.broadcast %c2_i32 : i32 to vector<64x16xi32>
    %8 = arith.cmpi sge, %2, %7 : vector<64x16xi32>
    %9 = arith.extui %8 : vector<64x16xi1> to vector<64x16xi32>
    %10 = arith.sitofp %9 : vector<64x16xi32> to vector<64x16xf32>
    %c4_i32 = arith.constant 4 : i32
    %11 = vector.broadcast %c4_i32 : i32 to vector<64x16xi32>
    %12 = arith.cmpi sge, %2, %11 : vector<64x16xi32>
    %13 = arith.extui %12 : vector<64x16xi1> to vector<64x16xi32>
    %14 = arith.sitofp %13 : vector<64x16xi32> to vector<64x16xf32>
    %15 = tpu.iota {dimensions = array<i32: 0>} : vector<64x4xi32>
    %c31_i32_0 = arith.constant 31 : i32
    %16 = vector.broadcast %c31_i32_0 : i32 to vector<64x4xi32>
    %17 = arith.andi %15, %16 : vector<64x4xi32>
    %c1_i32_1 = arith.constant 1 : i32
    %18 = vector.broadcast %c1_i32_1 : i32 to vector<64x4xi32>
    %19 = arith.cmpi sge, %17, %18 : vector<64x4xi32>
    %20 = arith.extui %19 : vector<64x4xi1> to vector<64x4xi32>
    %21 = arith.sitofp %20 : vector<64x4xi32> to vector<64x4xf32>
    %c0 = arith.constant 0 : index
    %c0_2 = arith.constant 0 : index
    %22 = vector.load %arg0[%c0, %c0_2] : memref<64x4xf32, #tpu.memory_space<vmem>>, vector<64x4xf32>
    %c0_3 = arith.constant 0 : index
    %c0_4 = arith.constant 0 : index
    %23 = vector.load %arg1[%c0_3, %c0_4] : memref<640x128xf32, #tpu.memory_space<vmem>>, vector<4x16xf32>
    %c8 = arith.constant 8 : index
    %c0_5 = arith.constant 0 : index
    %24 = vector.load %arg1[%c8, %c0_5] : memref<640x128xf32, #tpu.memory_space<vmem>>, vector<4x16xf32>
    %c16 = arith.constant 16 : index
    %c0_6 = arith.constant 0 : index
    %25 = vector.load %arg1[%c16, %c0_6] : memref<640x128xf32, #tpu.memory_space<vmem>>, vector<1x16xf32>
    %c1_i32_7 = arith.constant 1 : i32
    %26 = tpu.dynamic_rotate %22 by %c1_i32_7 dim 0 : vector<64x4xf32>, i32 -> vector<64x4xf32>
    %27 = arith.mulf %26, %21 : vector<64x4xf32>
    %cst = arith.constant dense<0.000000e+00> : vector<64x16xf32>
    %28 = tpu.matmul %27, %23, %cst {dimension_numbers = #tpu.dot_dimension_numbers<[1], [0], [0], [1], [0, 0, 1, 1], [], []>} : vector<64x4xf32>, vector<4x16xf32>, vector<64x16xf32> -> vector<64x16xf32>
    %cst_8 = arith.constant dense<0.000000e+00> : vector<64x16xf32>
    %29 = tpu.matmul %22, %24, %cst_8 {dimension_numbers = #tpu.dot_dimension_numbers<[1], [0], [0], [1], [0, 0, 1, 1], [], []>} : vector<64x4xf32>, vector<4x16xf32>, vector<64x16xf32> -> vector<64x16xf32>
    %30 = arith.addf %28, %29 : vector<64x16xf32>
    %31 = vector.broadcast %25 : vector<1x16xf32> to vector<64x16xf32>
    %32 = arith.addf %30, %31 : vector<64x16xf32>
    %cst_9 = arith.constant 0.000000e+00 : f32
    %33 = vector.broadcast %cst_9 : f32 to vector<64x64xf32>
    %c24 = arith.constant 24 : index
    %c0_10 = arith.constant 0 : index
    %34 = vector.load %arg1[%c24, %c0_10] : memref<640x128xf32, #tpu.memory_space<vmem>>, vector<16x16xf32>
    %c40 = arith.constant 40 : index
    %c0_11 = arith.constant 0 : index
    %35 = vector.load %arg1[%c40, %c0_11] : memref<640x128xf32, #tpu.memory_space<vmem>>, vector<16x16xf32>
    %c56 = arith.constant 56 : index
    %c0_12 = arith.constant 0 : index
    %36 = vector.load %arg1[%c56, %c0_12] : memref<640x128xf32, #tpu.memory_space<vmem>>, vector<1x16xf32>
    %c64 = arith.constant 64 : index
    %c0_13 = arith.constant 0 : index
    %37 = vector.load %arg1[%c64, %c0_13] : memref<640x128xf32, #tpu.memory_space<vmem>>, vector<16x64xf32>
    %c80 = arith.constant 80 : index
    %c0_14 = arith.constant 0 : index
    %38 = vector.load %arg1[%c80, %c0_14] : memref<640x128xf32, #tpu.memory_space<vmem>>, vector<1x64xf32>
    %c88 = arith.constant 88 : index
    %c0_15 = arith.constant 0 : index
    %39 = vector.load %arg1[%c88, %c0_15] : memref<640x128xf32, #tpu.memory_space<vmem>>, vector<16x16xf32>
    %c104 = arith.constant 104 : index
    %c0_16 = arith.constant 0 : index
    %40 = vector.load %arg1[%c104, %c0_16] : memref<640x128xf32, #tpu.memory_space<vmem>>, vector<1x16xf32>
    %c1_i32_17 = arith.constant 1 : i32
    %41 = tpu.dynamic_rotate %32 by %c1_i32_17 dim 0 : vector<64x16xf32>, i32 -> vector<64x16xf32>
    %42 = arith.mulf %41, %6 : vector<64x16xf32>
    %cst_18 = arith.constant dense<0.000000e+00> : vector<64x16xf32>
    %43 = tpu.matmul %42, %34, %cst_18 {dimension_numbers = #tpu.dot_dimension_numbers<[1], [0], [0], [1], [0, 0, 1, 1], [], []>} : vector<64x16xf32>, vector<16x16xf32>, vector<64x16xf32> -> vector<64x16xf32>
    %cst_19 = arith.constant dense<0.000000e+00> : vector<64x16xf32>
    %44 = tpu.matmul %32, %35, %cst_19 {dimension_numbers = #tpu.dot_dimension_numbers<[1], [0], [0], [1], [0, 0, 1, 1], [], []>} : vector<64x16xf32>, vector<16x16xf32>, vector<64x16xf32> -> vector<64x16xf32>
    %45 = arith.addf %43, %44 : vector<64x16xf32>
    %46 = vector.broadcast %36 : vector<1x16xf32> to vector<64x16xf32>
    %47 = arith.addf %45, %46 : vector<64x16xf32>
    %cst_20 = arith.constant 0.000000e+00 : f32
    %48 = vector.broadcast %cst_20 : f32 to vector<64x16xf32>
    %49 = arith.maximumf %47, %48 : vector<64x16xf32>
    %cst_21 = arith.constant dense<0.000000e+00> : vector<64x64xf32>
    %50 = tpu.matmul %49, %37, %cst_21 {dimension_numbers = #tpu.dot_dimension_numbers<[1], [0], [0], [1], [0, 0, 1, 1], [], []>} : vector<64x16xf32>, vector<16x64xf32>, vector<64x64xf32> -> vector<64x64xf32>
    %51 = arith.addf %33, %50 : vector<64x64xf32>
    %52 = vector.broadcast %38 : vector<1x64xf32> to vector<64x64xf32>
    %53 = arith.addf %51, %52 : vector<64x64xf32>
    %cst_22 = arith.constant dense<0.000000e+00> : vector<64x16xf32>
    %54 = tpu.matmul %49, %39, %cst_22 {dimension_numbers = #tpu.dot_dimension_numbers<[1], [0], [0], [1], [0, 0, 1, 1], [], []>} : vector<64x16xf32>, vector<16x16xf32>, vector<64x16xf32> -> vector<64x16xf32>
    %55 = vector.broadcast %40 : vector<1x16xf32> to vector<64x16xf32>
    %56 = arith.addf %54, %55 : vector<64x16xf32>
    %57 = arith.addf %56, %32 : vector<64x16xf32>
    %c112 = arith.constant 112 : index
    %c0_23 = arith.constant 0 : index
    %58 = vector.load %arg1[%c112, %c0_23] : memref<640x128xf32, #tpu.memory_space<vmem>>, vector<16x16xf32>
    %c128 = arith.constant 128 : index
    %c0_24 = arith.constant 0 : index
    %59 = vector.load %arg1[%c128, %c0_24] : memref<640x128xf32, #tpu.memory_space<vmem>>, vector<16x16xf32>
    %c144 = arith.constant 144 : index
    %c0_25 = arith.constant 0 : index
    %60 = vector.load %arg1[%c144, %c0_25] : memref<640x128xf32, #tpu.memory_space<vmem>>, vector<1x16xf32>
    %c152 = arith.constant 152 : index
    %c0_26 = arith.constant 0 : index
    %61 = vector.load %arg1[%c152, %c0_26] : memref<640x128xf32, #tpu.memory_space<vmem>>, vector<16x64xf32>
    %c168 = arith.constant 168 : index
    %c0_27 = arith.constant 0 : index
    %62 = vector.load %arg1[%c168, %c0_27] : memref<640x128xf32, #tpu.memory_space<vmem>>, vector<1x64xf32>
    %c176 = arith.constant 176 : index
    %c0_28 = arith.constant 0 : index
    %63 = vector.load %arg1[%c176, %c0_28] : memref<640x128xf32, #tpu.memory_space<vmem>>, vector<16x16xf32>
    %c192 = arith.constant 192 : index
    %c0_29 = arith.constant 0 : index
    %64 = vector.load %arg1[%c192, %c0_29] : memref<640x128xf32, #tpu.memory_space<vmem>>, vector<1x16xf32>
    %c2_i32_30 = arith.constant 2 : i32
    %65 = tpu.dynamic_rotate %57 by %c2_i32_30 dim 0 : vector<64x16xf32>, i32 -> vector<64x16xf32>
    %66 = arith.mulf %65, %10 : vector<64x16xf32>
    %cst_31 = arith.constant dense<0.000000e+00> : vector<64x16xf32>
    %67 = tpu.matmul %66, %58, %cst_31 {dimension_numbers = #tpu.dot_dimension_numbers<[1], [0], [0], [1], [0, 0, 1, 1], [], []>} : vector<64x16xf32>, vector<16x16xf32>, vector<64x16xf32> -> vector<64x16xf32>
    %cst_32 = arith.constant dense<0.000000e+00> : vector<64x16xf32>
    %68 = tpu.matmul %57, %59, %cst_32 {dimension_numbers = #tpu.dot_dimension_numbers<[1], [0], [0], [1], [0, 0, 1, 1], [], []>} : vector<64x16xf32>, vector<16x16xf32>, vector<64x16xf32> -> vector<64x16xf32>
    %69 = arith.addf %67, %68 : vector<64x16xf32>
    %70 = vector.broadcast %60 : vector<1x16xf32> to vector<64x16xf32>
    %71 = arith.addf %69, %70 : vector<64x16xf32>
    %cst_33 = arith.constant 0.000000e+00 : f32
    %72 = vector.broadcast %cst_33 : f32 to vector<64x16xf32>
    %73 = arith.maximumf %71, %72 : vector<64x16xf32>
    %cst_34 = arith.constant dense<0.000000e+00> : vector<64x64xf32>
    %74 = tpu.matmul %73, %61, %cst_34 {dimension_numbers = #tpu.dot_dimension_numbers<[1], [0], [0], [1], [0, 0, 1, 1], [], []>} : vector<64x16xf32>, vector<16x64xf32>, vector<64x64xf32> -> vector<64x64xf32>
    %75 = arith.addf %53, %74 : vector<64x64xf32>
    %76 = vector.broadcast %62 : vector<1x64xf32> to vector<64x64xf32>
    %77 = arith.addf %75, %76 : vector<64x64xf32>
    %cst_35 = arith.constant dense<0.000000e+00> : vector<64x16xf32>
    %78 = tpu.matmul %73, %63, %cst_35 {dimension_numbers = #tpu.dot_dimension_numbers<[1], [0], [0], [1], [0, 0, 1, 1], [], []>} : vector<64x16xf32>, vector<16x16xf32>, vector<64x16xf32> -> vector<64x16xf32>
    %79 = vector.broadcast %64 : vector<1x16xf32> to vector<64x16xf32>
    %80 = arith.addf %78, %79 : vector<64x16xf32>
    %81 = arith.addf %80, %57 : vector<64x16xf32>
    %c200 = arith.constant 200 : index
    %c0_36 = arith.constant 0 : index
    %82 = vector.load %arg1[%c200, %c0_36] : memref<640x128xf32, #tpu.memory_space<vmem>>, vector<16x16xf32>
    %c216 = arith.constant 216 : index
    %c0_37 = arith.constant 0 : index
    %83 = vector.load %arg1[%c216, %c0_37] : memref<640x128xf32, #tpu.memory_space<vmem>>, vector<16x16xf32>
    %c232 = arith.constant 232 : index
    %c0_38 = arith.constant 0 : index
    %84 = vector.load %arg1[%c232, %c0_38] : memref<640x128xf32, #tpu.memory_space<vmem>>, vector<1x16xf32>
    %c240 = arith.constant 240 : index
    %c0_39 = arith.constant 0 : index
    %85 = vector.load %arg1[%c240, %c0_39] : memref<640x128xf32, #tpu.memory_space<vmem>>, vector<16x64xf32>
    %c256 = arith.constant 256 : index
    %c0_40 = arith.constant 0 : index
    %86 = vector.load %arg1[%c256, %c0_40] : memref<640x128xf32, #tpu.memory_space<vmem>>, vector<1x64xf32>
    %c264 = arith.constant 264 : index
    %c0_41 = arith.constant 0 : index
    %87 = vector.load %arg1[%c264, %c0_41] : memref<640x128xf32, #tpu.memory_space<vmem>>, vector<16x16xf32>
    %c280 = arith.constant 280 : index
    %c0_42 = arith.constant 0 : index
    %88 = vector.load %arg1[%c280, %c0_42] : memref<640x128xf32, #tpu.memory_space<vmem>>, vector<1x16xf32>
    %c4_i32_43 = arith.constant 4 : i32
    %89 = tpu.dynamic_rotate %81 by %c4_i32_43 dim 0 : vector<64x16xf32>, i32 -> vector<64x16xf32>
    %90 = arith.mulf %89, %14 : vector<64x16xf32>
    %cst_44 = arith.constant dense<0.000000e+00> : vector<64x16xf32>
    %91 = tpu.matmul %90, %82, %cst_44 {dimension_numbers = #tpu.dot_dimension_numbers<[1], [0], [0], [1], [0, 0, 1, 1], [], []>} : vector<64x16xf32>, vector<16x16xf32>, vector<64x16xf32> -> vector<64x16xf32>
    %cst_45 = arith.constant dense<0.000000e+00> : vector<64x16xf32>
    %92 = tpu.matmul %81, %83, %cst_45 {dimension_numbers = #tpu.dot_dimension_numbers<[1], [0], [0], [1], [0, 0, 1, 1], [], []>} : vector<64x16xf32>, vector<16x16xf32>, vector<64x16xf32> -> vector<64x16xf32>
    %93 = arith.addf %91, %92 : vector<64x16xf32>
    %94 = vector.broadcast %84 : vector<1x16xf32> to vector<64x16xf32>
    %95 = arith.addf %93, %94 : vector<64x16xf32>
    %cst_46 = arith.constant 0.000000e+00 : f32
    %96 = vector.broadcast %cst_46 : f32 to vector<64x16xf32>
    %97 = arith.maximumf %95, %96 : vector<64x16xf32>
    %cst_47 = arith.constant dense<0.000000e+00> : vector<64x64xf32>
    %98 = tpu.matmul %97, %85, %cst_47 {dimension_numbers = #tpu.dot_dimension_numbers<[1], [0], [0], [1], [0, 0, 1, 1], [], []>} : vector<64x16xf32>, vector<16x64xf32>, vector<64x64xf32> -> vector<64x64xf32>
    %99 = arith.addf %77, %98 : vector<64x64xf32>
    %100 = vector.broadcast %86 : vector<1x64xf32> to vector<64x64xf32>
    %101 = arith.addf %99, %100 : vector<64x64xf32>
    %cst_48 = arith.constant dense<0.000000e+00> : vector<64x16xf32>
    %102 = tpu.matmul %97, %87, %cst_48 {dimension_numbers = #tpu.dot_dimension_numbers<[1], [0], [0], [1], [0, 0, 1, 1], [], []>} : vector<64x16xf32>, vector<16x16xf32>, vector<64x16xf32> -> vector<64x16xf32>
    %103 = vector.broadcast %88 : vector<1x16xf32> to vector<64x16xf32>
    %104 = arith.addf %102, %103 : vector<64x16xf32>
    %105 = arith.addf %104, %81 : vector<64x16xf32>
    %c288 = arith.constant 288 : index
    %c0_49 = arith.constant 0 : index
    %106 = vector.load %arg1[%c288, %c0_49] : memref<640x128xf32, #tpu.memory_space<vmem>>, vector<16x16xf32>
    %c304 = arith.constant 304 : index
    %c0_50 = arith.constant 0 : index
    %107 = vector.load %arg1[%c304, %c0_50] : memref<640x128xf32, #tpu.memory_space<vmem>>, vector<16x16xf32>
    %c320 = arith.constant 320 : index
    %c0_51 = arith.constant 0 : index
    %108 = vector.load %arg1[%c320, %c0_51] : memref<640x128xf32, #tpu.memory_space<vmem>>, vector<1x16xf32>
    %c328 = arith.constant 328 : index
    %c0_52 = arith.constant 0 : index
    %109 = vector.load %arg1[%c328, %c0_52] : memref<640x128xf32, #tpu.memory_space<vmem>>, vector<16x64xf32>
    %c344 = arith.constant 344 : index
    %c0_53 = arith.constant 0 : index
    %110 = vector.load %arg1[%c344, %c0_53] : memref<640x128xf32, #tpu.memory_space<vmem>>, vector<1x64xf32>
    %c352 = arith.constant 352 : index
    %c0_54 = arith.constant 0 : index
    %111 = vector.load %arg1[%c352, %c0_54] : memref<640x128xf32, #tpu.memory_space<vmem>>, vector<16x16xf32>
    %c368 = arith.constant 368 : index
    %c0_55 = arith.constant 0 : index
    %112 = vector.load %arg1[%c368, %c0_55] : memref<640x128xf32, #tpu.memory_space<vmem>>, vector<1x16xf32>
    %c1_i32_56 = arith.constant 1 : i32
    %113 = tpu.dynamic_rotate %105 by %c1_i32_56 dim 0 : vector<64x16xf32>, i32 -> vector<64x16xf32>
    %114 = arith.mulf %113, %6 : vector<64x16xf32>
    %cst_57 = arith.constant dense<0.000000e+00> : vector<64x16xf32>
    %115 = tpu.matmul %114, %106, %cst_57 {dimension_numbers = #tpu.dot_dimension_numbers<[1], [0], [0], [1], [0, 0, 1, 1], [], []>} : vector<64x16xf32>, vector<16x16xf32>, vector<64x16xf32> -> vector<64x16xf32>
    %cst_58 = arith.constant dense<0.000000e+00> : vector<64x16xf32>
    %116 = tpu.matmul %105, %107, %cst_58 {dimension_numbers = #tpu.dot_dimension_numbers<[1], [0], [0], [1], [0, 0, 1, 1], [], []>} : vector<64x16xf32>, vector<16x16xf32>, vector<64x16xf32> -> vector<64x16xf32>
    %117 = arith.addf %115, %116 : vector<64x16xf32>
    %118 = vector.broadcast %108 : vector<1x16xf32> to vector<64x16xf32>
    %119 = arith.addf %117, %118 : vector<64x16xf32>
    %cst_59 = arith.constant 0.000000e+00 : f32
    %120 = vector.broadcast %cst_59 : f32 to vector<64x16xf32>
    %121 = arith.maximumf %119, %120 : vector<64x16xf32>
    %cst_60 = arith.constant dense<0.000000e+00> : vector<64x64xf32>
    %122 = tpu.matmul %121, %109, %cst_60 {dimension_numbers = #tpu.dot_dimension_numbers<[1], [0], [0], [1], [0, 0, 1, 1], [], []>} : vector<64x16xf32>, vector<16x64xf32>, vector<64x64xf32> -> vector<64x64xf32>
    %123 = arith.addf %101, %122 : vector<64x64xf32>
    %124 = vector.broadcast %110 : vector<1x64xf32> to vector<64x64xf32>
    %125 = arith.addf %123, %124 : vector<64x64xf32>
    %cst_61 = arith.constant dense<0.000000e+00> : vector<64x16xf32>
    %126 = tpu.matmul %121, %111, %cst_61 {dimension_numbers = #tpu.dot_dimension_numbers<[1], [0], [0], [1], [0, 0, 1, 1], [], []>} : vector<64x16xf32>, vector<16x16xf32>, vector<64x16xf32> -> vector<64x16xf32>
    %127 = vector.broadcast %112 : vector<1x16xf32> to vector<64x16xf32>
    %128 = arith.addf %126, %127 : vector<64x16xf32>
    %129 = arith.addf %128, %105 : vector<64x16xf32>
    %c376 = arith.constant 376 : index
    %c0_62 = arith.constant 0 : index
    %130 = vector.load %arg1[%c376, %c0_62] : memref<640x128xf32, #tpu.memory_space<vmem>>, vector<16x16xf32>
    %c392 = arith.constant 392 : index
    %c0_63 = arith.constant 0 : index
    %131 = vector.load %arg1[%c392, %c0_63] : memref<640x128xf32, #tpu.memory_space<vmem>>, vector<16x16xf32>
    %c408 = arith.constant 408 : index
    %c0_64 = arith.constant 0 : index
    %132 = vector.load %arg1[%c408, %c0_64] : memref<640x128xf32, #tpu.memory_space<vmem>>, vector<1x16xf32>
    %c416 = arith.constant 416 : index
    %c0_65 = arith.constant 0 : index
    %133 = vector.load %arg1[%c416, %c0_65] : memref<640x128xf32, #tpu.memory_space<vmem>>, vector<16x64xf32>
    %c432 = arith.constant 432 : index
    %c0_66 = arith.constant 0 : index
    %134 = vector.load %arg1[%c432, %c0_66] : memref<640x128xf32, #tpu.memory_space<vmem>>, vector<1x64xf32>
    %c440 = arith.constant 440 : index
    %c0_67 = arith.constant 0 : index
    %135 = vector.load %arg1[%c440, %c0_67] : memref<640x128xf32, #tpu.memory_space<vmem>>, vector<16x16xf32>
    %c456 = arith.constant 456 : index
    %c0_68 = arith.constant 0 : index
    %136 = vector.load %arg1[%c456, %c0_68] : memref<640x128xf32, #tpu.memory_space<vmem>>, vector<1x16xf32>
    %c2_i32_69 = arith.constant 2 : i32
    %137 = tpu.dynamic_rotate %129 by %c2_i32_69 dim 0 : vector<64x16xf32>, i32 -> vector<64x16xf32>
    %138 = arith.mulf %137, %10 : vector<64x16xf32>
    %cst_70 = arith.constant dense<0.000000e+00> : vector<64x16xf32>
    %139 = tpu.matmul %138, %130, %cst_70 {dimension_numbers = #tpu.dot_dimension_numbers<[1], [0], [0], [1], [0, 0, 1, 1], [], []>} : vector<64x16xf32>, vector<16x16xf32>, vector<64x16xf32> -> vector<64x16xf32>
    %cst_71 = arith.constant dense<0.000000e+00> : vector<64x16xf32>
    %140 = tpu.matmul %129, %131, %cst_71 {dimension_numbers = #tpu.dot_dimension_numbers<[1], [0], [0], [1], [0, 0, 1, 1], [], []>} : vector<64x16xf32>, vector<16x16xf32>, vector<64x16xf32> -> vector<64x16xf32>
    %141 = arith.addf %139, %140 : vector<64x16xf32>
    %142 = vector.broadcast %132 : vector<1x16xf32> to vector<64x16xf32>
    %143 = arith.addf %141, %142 : vector<64x16xf32>
    %cst_72 = arith.constant 0.000000e+00 : f32
    %144 = vector.broadcast %cst_72 : f32 to vector<64x16xf32>
    %145 = arith.maximumf %143, %144 : vector<64x16xf32>
    %cst_73 = arith.constant dense<0.000000e+00> : vector<64x64xf32>
    %146 = tpu.matmul %145, %133, %cst_73 {dimension_numbers = #tpu.dot_dimension_numbers<[1], [0], [0], [1], [0, 0, 1, 1], [], []>} : vector<64x16xf32>, vector<16x64xf32>, vector<64x64xf32> -> vector<64x64xf32>
    %147 = arith.addf %125, %146 : vector<64x64xf32>
    %148 = vector.broadcast %134 : vector<1x64xf32> to vector<64x64xf32>
    %149 = arith.addf %147, %148 : vector<64x64xf32>
    %cst_74 = arith.constant dense<0.000000e+00> : vector<64x16xf32>
    %150 = tpu.matmul %145, %135, %cst_74 {dimension_numbers = #tpu.dot_dimension_numbers<[1], [0], [0], [1], [0, 0, 1, 1], [], []>} : vector<64x16xf32>, vector<16x16xf32>, vector<64x16xf32> -> vector<64x16xf32>
    %151 = vector.broadcast %136 : vector<1x16xf32> to vector<64x16xf32>
    %152 = arith.addf %150, %151 : vector<64x16xf32>
    %153 = arith.addf %152, %129 : vector<64x16xf32>
    %c464 = arith.constant 464 : index
    %c0_75 = arith.constant 0 : index
    %154 = vector.load %arg1[%c464, %c0_75] : memref<640x128xf32, #tpu.memory_space<vmem>>, vector<16x16xf32>
    %c480 = arith.constant 480 : index
    %c0_76 = arith.constant 0 : index
    %155 = vector.load %arg1[%c480, %c0_76] : memref<640x128xf32, #tpu.memory_space<vmem>>, vector<16x16xf32>
    %c496 = arith.constant 496 : index
    %c0_77 = arith.constant 0 : index
    %156 = vector.load %arg1[%c496, %c0_77] : memref<640x128xf32, #tpu.memory_space<vmem>>, vector<1x16xf32>
    %c504 = arith.constant 504 : index
    %c0_78 = arith.constant 0 : index
    %157 = vector.load %arg1[%c504, %c0_78] : memref<640x128xf32, #tpu.memory_space<vmem>>, vector<16x64xf32>
    %c520 = arith.constant 520 : index
    %c0_79 = arith.constant 0 : index
    %158 = vector.load %arg1[%c520, %c0_79] : memref<640x128xf32, #tpu.memory_space<vmem>>, vector<1x64xf32>
    %c4_i32_80 = arith.constant 4 : i32
    %159 = tpu.dynamic_rotate %153 by %c4_i32_80 dim 0 : vector<64x16xf32>, i32 -> vector<64x16xf32>
    %160 = arith.mulf %159, %14 : vector<64x16xf32>
    %cst_81 = arith.constant dense<0.000000e+00> : vector<64x16xf32>
    %161 = tpu.matmul %160, %154, %cst_81 {dimension_numbers = #tpu.dot_dimension_numbers<[1], [0], [0], [1], [0, 0, 1, 1], [], []>} : vector<64x16xf32>, vector<16x16xf32>, vector<64x16xf32> -> vector<64x16xf32>
    %cst_82 = arith.constant dense<0.000000e+00> : vector<64x16xf32>
    %162 = tpu.matmul %153, %155, %cst_82 {dimension_numbers = #tpu.dot_dimension_numbers<[1], [0], [0], [1], [0, 0, 1, 1], [], []>} : vector<64x16xf32>, vector<16x16xf32>, vector<64x16xf32> -> vector<64x16xf32>
    %163 = arith.addf %161, %162 : vector<64x16xf32>
    %164 = vector.broadcast %156 : vector<1x16xf32> to vector<64x16xf32>
    %165 = arith.addf %163, %164 : vector<64x16xf32>
    %cst_83 = arith.constant 0.000000e+00 : f32
    %166 = vector.broadcast %cst_83 : f32 to vector<64x16xf32>
    %167 = arith.maximumf %165, %166 : vector<64x16xf32>
    %cst_84 = arith.constant dense<0.000000e+00> : vector<64x64xf32>
    %168 = tpu.matmul %167, %157, %cst_84 {dimension_numbers = #tpu.dot_dimension_numbers<[1], [0], [0], [1], [0, 0, 1, 1], [], []>} : vector<64x16xf32>, vector<16x64xf32>, vector<64x64xf32> -> vector<64x64xf32>
    %169 = arith.addf %149, %168 : vector<64x64xf32>
    %170 = vector.broadcast %158 : vector<1x64xf32> to vector<64x64xf32>
    %171 = arith.addf %169, %170 : vector<64x64xf32>
    %c552 = arith.constant 552 : index
    %c0_85 = arith.constant 0 : index
    %172 = vector.load %arg1[%c552, %c0_85] : memref<640x128xf32, #tpu.memory_space<vmem>>, vector<64x128xf32>
    %c616 = arith.constant 616 : index
    %c0_86 = arith.constant 0 : index
    %173 = vector.load %arg1[%c616, %c0_86] : memref<640x128xf32, #tpu.memory_space<vmem>>, vector<1x128xf32>
    %c624 = arith.constant 624 : index
    %c0_87 = arith.constant 0 : index
    %174 = vector.load %arg1[%c624, %c0_87] : memref<640x128xf32, #tpu.memory_space<vmem>>, vector<1x128xf32>
    %c632 = arith.constant 632 : index
    %c0_88 = arith.constant 0 : index
    %175 = vector.load %arg1[%c632, %c0_88] : memref<640x128xf32, #tpu.memory_space<vmem>>, vector<1x64xf32>
    %cst_89 = arith.constant 0.000000e+00 : f32
    %176 = vector.broadcast %cst_89 : f32 to vector<64x64xf32>
    %177 = arith.maximumf %171, %176 : vector<64x64xf32>
    %cst_90 = arith.constant dense<0.000000e+00> : vector<64x128xf32>
    %178 = tpu.matmul %177, %172, %cst_90 {dimension_numbers = #tpu.dot_dimension_numbers<[1], [0], [0], [1], [0, 0, 1, 1], [], []>} : vector<64x64xf32>, vector<64x128xf32>, vector<64x128xf32> -> vector<64x128xf32>
    %179 = vector.broadcast %173 : vector<1x128xf32> to vector<64x128xf32>
    %180 = arith.addf %178, %179 : vector<64x128xf32>
    %cst_91 = arith.constant 0.000000e+00 : f32
    %181 = vector.broadcast %cst_91 : f32 to vector<64x128xf32>
    %182 = arith.maximumf %180, %181 : vector<64x128xf32>
    %cst_92 = arith.constant dense<0.000000e+00> : vector<1x64xf32>
    %183 = tpu.matmul %174, %182, %cst_92 {dimension_numbers = #tpu.dot_dimension_numbers<[1], [1], [0], [0], [0, 0, 1, 0], [], []>} : vector<1x128xf32>, vector<64x128xf32>, vector<1x64xf32> -> vector<1x64xf32>
    %184 = arith.addf %183, %175 : vector<1x64xf32>
    %c0_93 = arith.constant 0 : index
    %c0_94 = arith.constant 0 : index
    %185 = vector.load %arg2[%c0_93, %c0_94] : memref<1x64xf32, #tpu.memory_space<vmem>>, vector<1x64xf32>
    tpu.vector_store %arg2[%c0_93, %c0_94], %184 {strides = array<i32>} : memref<1x64xf32, #tpu.memory_space<vmem>>, vector<1x64xf32>,
    return
  }
}

</mosaic_0001>

<llo_original>
// kernel: wavenet_pallas.1
$region0: #{wavenet_pallas.1}
  #allocation0 [shape = 'u32[]', space=smem, size = 0x4, offset = 0x4, fixed_abs, tag = 'smem constant byte address 0x4 - core index']
  #allocation1 [shape = 'u32[72,128]{1,0:T(1,128)}', space=vmem, size = 0x9000, scoped, tag = 'internal scratch']
  %s0 = inlined_call_operand.vmem [shape: f32[64,4], index: 0, kind: input, shape index: {}]
  %s1 = inlined_call_operand.hbm [shape: f32[640,128], index: 1, kind: input, shape index: {}]
  %s2 = inlined_call_operand.vmem [shape: f32[1,64], index: 2, kind: output, shape index: {}]
  %s3 = sld [smem:[#allocation0]]
  $region22: #{wavenet_pallas.1} parent=0
    _
  %s5 = ssub.s32 1, %s3
  %s6 = scalar_select 0, %s5, %s3
  $region1: #{wavenet_pallas.1} parent=0
    #allocation2 [shape = 'u8[327680]{0}', space=vmem, size = 0x50000, scoped, tag = 'input window, operand 1, single buffered']
    #allocation3 [shape = 's32[1]{0}', space=sflag, size = 0x4, scoped, tag = 'scoped memory for wavenet_pallas.1']
    %7 = vsyncpa [#allocation3], 0
    // Predicated region
    $region2: #{wavenet_pallas.1} parent=1 // pred_check
      _
    $region3: #{wavenet_pallas.1} parent=1 // pred_check_branch
      %9 = sbr.rel (0) target = $region5
    $region4: #{wavenet_pallas.1} parent=1 // pred_region
      _
    $region5: #{wavenet_pallas.1} parent=1 // pred_fallthru
      _
    // Predicated region
    $region6: #{wavenet_pallas.1} parent=1 // pred_check
      _
    $region7: #{wavenet_pallas.1} parent=1 // pred_check_branch
      %11 = sbr.rel (0) target = $region9
    $region8: #{wavenet_pallas.1} parent=1 // pred_region
      %13 = vsyncadd [#allocation3], 0
      %s14 = sshll.u32 %s1, 4
      %s15 = int_to_ptr.hbm [resolvable:$true] %s14
      %s16 = sshll.u32 [#allocation2], 4
      %s17 = int_to_ptr.vmem [resolvable:$true] %s16
      %22 = dma.hbm_to_vmem [thread:$0]  %s15, 10240, %s17, [#allocation3], 128, 128, 8
    $region9: #{wavenet_pallas.1} parent=1 // pred_fallthru
      _
    // Predicated region
    $region10: #{wavenet_pallas.1} parent=1 // pred_check
      _
    $region11: #{wavenet_pallas.1} parent=1 // pred_check_branch
      %24 = sbr.rel (0) target = $region13
    $region12: #{wavenet_pallas.1} parent=1 // pred_region
      %26 = dma.done [#allocation3], 10240
    $region13: #{wavenet_pallas.1} parent=1 // pred_fallthru
      _
    %v27 = vlaneseq
    %v28 = vshrl.u32 %v27, 7
    %v29 = vadd.s32 %v28, 8
    %v30 = vadd.s32 %v28, 16
    %v31 = vadd.s32 %v28, 24
    %v32 = vadd.s32 %v28, 32
    %v33 = vadd.s32 %v28, 40
    %v34 = vadd.s32 %v28, 48
    %v35 = vadd.s32 %v28, 56
    %v36 = vand.u32 %v28, 31
    %v37 = vand.u32 %v29, 31
    %v38 = vand.u32 %v30, 31
    %v39 = vand.u32 %v31, 31
    %v40 = vand.u32 %v32, 31
    %v41 = vand.u32 %v33, 31
    %v42 = vand.u32 %v34, 31
    %v43 = vand.u32 %v35, 31
    %vm44 = vcmp.ge.s32.totalorder %v36, 1
    %vm45 = vcmp.ge.s32.totalorder %v37, 1
    %vm46 = vcmp.ge.s32.totalorder %v38, 1
    %vm47 = vcmp.ge.s32.totalorder %v39, 1
    %vm48 = vcmp.ge.s32.totalorder %v40, 1
    %vm49 = vcmp.ge.s32.totalorder %v41, 1
    %vm50 = vcmp.ge.s32.totalorder %v42, 1
    %vm51 = vcmp.ge.s32.totalorder %v43, 1
    %v52 = vsel %vm44, 1, 0
    %v53 = vsel %vm45, 1, 0
    %v54 = vsel %vm46, 1, 0
    %v55 = vsel %vm47, 1, 0
    %v56 = vsel %vm48, 1, 0
    %v57 = vsel %vm49, 1, 0
    %v58 = vsel %vm50, 1, 0
    %v59 = vsel %vm51, 1, 0
    %v60 = vcvt.s32.f32 %v52
    %v61 = vcvt.s32.f32 %v53
    %v62 = vcvt.s32.f32 %v54
    %v63 = vcvt.s32.f32 %v55
    %v64 = vcvt.s32.f32 %v56
    %v65 = vcvt.s32.f32 %v57
    %v66 = vcvt.s32.f32 %v58
    %v67 = vcvt.s32.f32 %v59
    %vm68 = vcmp.ge.s32.totalorder %v36, 2
    %vm69 = vcmp.ge.s32.totalorder %v37, 2
    %vm70 = vcmp.ge.s32.totalorder %v38, 2
    %vm71 = vcmp.ge.s32.totalorder %v39, 2
    %vm72 = vcmp.ge.s32.totalorder %v40, 2
    %vm73 = vcmp.ge.s32.totalorder %v41, 2
    %vm74 = vcmp.ge.s32.totalorder %v42, 2
    %vm75 = vcmp.ge.s32.totalorder %v43, 2
    %v76 = vsel %vm68, 1, 0
    %v77 = vsel %vm69, 1, 0
    %v78 = vsel %vm70, 1, 0
    %v79 = vsel %vm71, 1, 0
    %v80 = vsel %vm72, 1, 0
    %v81 = vsel %vm73, 1, 0
    %v82 = vsel %vm74, 1, 0
    %v83 = vsel %vm75, 1, 0
    %v84 = vcvt.s32.f32 %v76
    %v85 = vcvt.s32.f32 %v77
    %v86 = vcvt.s32.f32 %v78
    %v87 = vcvt.s32.f32 %v79
    %v88 = vcvt.s32.f32 %v80
    %v89 = vcvt.s32.f32 %v81
    %v90 = vcvt.s32.f32 %v82
    %v91 = vcvt.s32.f32 %v83
    %vm92 = vcmp.ge.s32.totalorder %v36, 4
    %vm93 = vcmp.ge.s32.totalorder %v37, 4
    %vm94 = vcmp.ge.s32.totalorder %v38, 4
    %vm95 = vcmp.ge.s32.totalorder %v39, 4
    %vm96 = vcmp.ge.s32.totalorder %v40, 4
    %vm97 = vcmp.ge.s32.totalorder %v41, 4
    %vm98 = vcmp.ge.s32.totalorder %v42, 4
    %vm99 = vcmp.ge.s32.totalorder %v43, 4
    %v100 = vsel %vm92, 1, 0
    %v101 = vsel %vm93, 1, 0
    %v102 = vsel %vm94, 1, 0
    %v103 = vsel %vm95, 1, 0
    %v104 = vsel %vm96, 1, 0
    %v105 = vsel %vm97, 1, 0
    %v106 = vsel %vm98, 1, 0
    %v107 = vsel %vm99, 1, 0
    %v108 = vcvt.s32.f32 %v100
    %v109 = vcvt.s32.f32 %v101
    %v110 = vcvt.s32.f32 %v102
    %v111 = vcvt.s32.f32 %v103
    %v112 = vcvt.s32.f32 %v104
    %v113 = vcvt.s32.f32 %v105
    %v114 = vcvt.s32.f32 %v106
    %v115 = vcvt.s32.f32 %v107
    %v116 = vld [vmem:[%s0] sm:$0xff]
    %v117 = vld [vmem:[%s0 + $0x8] sm:$0xff]
    %v118 = vld [vmem:[%s0 + $0x10] sm:$0xff]
    %v119 = vld [vmem:[%s0 + $0x18] sm:$0xff]
    %v120 = vld [vmem:[%s0 + $0x20] sm:$0xff]
    %v121 = vld [vmem:[%s0 + $0x28] sm:$0xff]
    %v122 = vld [vmem:[%s0 + $0x30] sm:$0xff]
    %v123 = vld [vmem:[%s0 + $0x38] sm:$0xff]
    %v124 = vld [vmem:[#allocation2] sm:$0xf]
    %v125 = vld [vmem:[#allocation2 + $0x8] sm:$0xf]
    %v126 = vld [vmem:[#allocation2 + $0x10] sm:$0x1]
    %v127 = vrot.slane %v116, 7
    %v128 = vrot.slane %v117, 7
    %v129 = vrot.slane %v118, 7
    %v130 = vrot.slane %v119, 7
    %v131 = vrot.slane %v120, 7
    %v132 = vrot.slane %v121, 7
    %v133 = vrot.slane %v122, 7
    %v134 = vrot.slane %v123, 7
    %vm135 = vcmp.lt.s32.totalorder %v28, 1
    %v136 = vsel %vm135, %v133, %v134
    %v137 = vsel %vm135, %v132, %v133
    %v138 = vsel %vm135, %v131, %v132
    %v139 = vsel %vm135, %v130, %v131
    %v140 = vsel %vm135, %v129, %v130
    %v141 = vsel %vm135, %v128, %v129
    %v142 = vsel %vm135, %v127, %v128
    %v143 = vsel %vm135, %v134, %v127
    %v144 = vmul.f32 %v143, %v60
    %v145 = vmul.f32 %v142, %v61
    %v146 = vmul.f32 %v141, %v62
    %v147 = vmul.f32 %v140, %v63
    %v148 = vmul.f32 %v139, %v64
    %v149 = vmul.f32 %v138, %v65
    %v150 = vmul.f32 %v137, %v66
    %v151 = vmul.f32 %v136, %v67
    %vm152 = vcmask 31744
    %v154 = vsel %vm152, %v116, 0
    %v157 = vsel %vm152, %v117, 0
    %v160 = vsel %vm152, %v118, 0
    %v163 = vsel %vm152, %v119, 0
    %v166 = vsel %vm152, %v120, 0
    %v169 = vsel %vm152, %v121, 0
    %v172 = vsel %vm152, %v122, 0
    %v175 = vsel %vm152, %v123, 0
    %vm177 = vcmask 1043456
    %v179 = vsel %vm177, %v125, 0
    %181 = vmatpush.msra.mxu0 0.0
    %182 = vmatpush.msra.mxu0 0.0
    %183 = vmatpush.msra.mxu0 0.0
    %184 = vmatpush.msra.mxu0 0.0
    %185 = vmatpush.msra.mxu0 0.0
    %186 = vmatpush.msra.mxu0 0.0
    %187 = vmatpush.msra.mxu0 0.0
    %188 = vmatpush.msra.mxu0 0.0
    %189 = vmatpush.msra.mxu0 0.0
    %190 = vmatpush.msra.mxu0 0.0
    %191 = vmatpush.msra.mxu0 0.0
    %192 = vmatpush.msra.mxu0 0.0
    %193 = vmatpush.msra.mxu0 0.0
    %194 = vmatpush.msra.mxu0 0.0
    %195 = vmatpush.msra.mxu0 0.0
    %196 = vmatpush.msra.mxu0 %v179
    %197 = vmatmul.f32.gmra.mxu0 %v154
    %v198 = vpop.f32.mrf.mxu0
    %v199 = vadd.f32 0.0, %v198
    %200 = vmatmul.f32.gmra.mxu0 %v157
    %v201 = vpop.f32.mrf.mxu0
    %v202 = vadd.f32 0.0, %v201
    %203 = vmatmul.f32.gmra.mxu0 %v160
    %v204 = vpop.f32.mrf.mxu0
    %v205 = vadd.f32 0.0, %v204
    %206 = vmatmul.f32.gmra.mxu0 %v163
    %v207 = vpop.f32.mrf.mxu0
    %v208 = vadd.f32 0.0, %v207
    %209 = vmatmul.f32.gmra.mxu0 %v166
    %v210 = vpop.f32.mrf.mxu0
    %v211 = vadd.f32 0.0, %v210
    %212 = vmatmul.f32.gmra.mxu0 %v169
    %v213 = vpop.f32.mrf.mxu0
    %v214 = vadd.f32 0.0, %v213
    %215 = vmatmul.f32.gmra.mxu0 %v172
    %v216 = vpop.f32.mrf.mxu0
    %v217 = vadd.f32 0.0, %v216
    %218 = vmatmul.f32.gmra.mxu0 %v175
    %v219 = vpop.f32.mrf.mxu0
    %v220 = vadd.f32 0.0, %v219
    %221 = vdwg.mxu0
    %v223 = vsel %vm152, %v144, 0
    %v226 = vsel %vm152, %v145, 0
    %v229 = vsel %vm152, %v146, 0
    %v232 = vsel %vm152, %v147, 0
    %v235 = vsel %vm152, %v148, 0
    %v238 = vsel %vm152, %v149, 0
    %v241 = vsel %vm152, %v150, 0
    %v244 = vsel %vm152, %v151, 0
    %v247 = vsel %vm177, %v124, 0
    %249 = vmatpush.msra.mxu0 0.0
    %250 = vmatpush.msra.mxu0 0.0
    %251 = vmatpush.msra.mxu0 0.0
    %252 = vmatpush.msra.mxu0 0.0
    %253 = vmatpush.msra.mxu0 0.0
    %254 = vmatpush.msra.mxu0 0.0
    %255 = vmatpush.msra.mxu0 0.0
    %256 = vmatpush.msra.mxu0 0.0
    %257 = vmatpush.msra.mxu0 0.0
    %258 = vmatpush.msra.mxu0 0.0
    %259 = vmatpush.msra.mxu0 0.0
    %260 = vmatpush.msra.mxu0 0.0
    %261 = vmatpush.msra.mxu0 0.0
    %262 = vmatpush.msra.mxu0 0.0
    %263 = vmatpush.msra.mxu0 0.0
    %264 = vmatpush.msra.mxu0 %v247
    %265 = vmatmul.f32.gmra.mxu0 %v223
    %v266 = vpop.f32.mrf.mxu0
    %v267 = vadd.f32 %v199, %v266
    %268 = vmatmul.f32.gmra.mxu0 %v226
    %v269 = vpop.f32.mrf.mxu0
    %v270 = vadd.f32 %v202, %v269
    %271 = vmatmul.f32.gmra.mxu0 %v229
    %v272 = vpop.f32.mrf.mxu0
    %v273 = vadd.f32 %v205, %v272
    %274 = vmatmul.f32.gmra.mxu0 %v232
    %v275 = vpop.f32.mrf.mxu0
    %v276 = vadd.f32 %v208, %v275
    %277 = vmatmul.f32.gmra.mxu0 %v235
    %v278 = vpop.f32.mrf.mxu0
    %v279 = vadd.f32 %v211, %v278
    %280 = vmatmul.f32.gmra.mxu0 %v238
    %v281 = vpop.f32.mrf.mxu0
    %v282 = vadd.f32 %v214, %v281
    %283 = vmatmul.f32.gmra.mxu0 %v241
    %v284 = vpop.f32.mrf.mxu0
    %v285 = vadd.f32 %v217, %v284
    %286 = vmatmul.f32.gmra.mxu0 %v244
    %v287 = vpop.f32.mrf.mxu0
    %v288 = vadd.f32 %v220, %v287
    %289 = vdwg.mxu0
    %v290 = vperm.slane %v126, 0
    %v291 = vadd.f32 %v267, %v290
    %v292 = vadd.f32 %v270, %v290
    %v293 = vadd.f32 %v273, %v290
    %v294 = vadd.f32 %v276, %v290
    %v295 = vadd.f32 %v279, %v290
    %v296 = vadd.f32 %v282, %v290
    %v297 = vadd.f32 %v285, %v290
    %v298 = vadd.f32 %v288, %v290
    %v299 = vld [vmem:[#allocation2 + $0x18] sm:$0xff]
    %v300 = vld [vmem:[#allocation2 + $0x20] sm:$0xff]
    %v301 = vld [vmem:[#allocation2 + $0x28] sm:$0xff]
    %v302 = vld [vmem:[#allocation2 + $0x30] sm:$0xff]
    %v303 = vld [vmem:[#allocation2 + $0x38] sm:$0x1]
    %v304 = vld [vmem:[#allocation2 + $0x40] sm:$0xff]
    %v305 = vld [vmem:[#allocation2 + $0x48] sm:$0xff]
    %v306 = vld [vmem:[#allocation2 + $0x50] sm:$0x1]
    %v307 = vld [vmem:[#allocation2 + $0x58] sm:$0xff]
    %v308 = vld [vmem:[#allocation2 + $0x60] sm:$0xff]
    %v309 = vld [vmem:[#allocation2 + $0x68] sm:$0x1]
    %v310 = vrot.slane %v291, 7
    %v311 = vrot.slane %v292, 7
    %v312 = vrot.slane %v293, 7
    %v313 = vrot.slane %v294, 7
    %v314 = vrot.slane %v295, 7
    %v315 = vrot.slane %v296, 7
    %v316 = vrot.slane %v297, 7
    %v317 = vrot.slane %v298, 7
    %v318 = vsel %vm135, %v316, %v317
    %v319 = vsel %vm135, %v315, %v316
    %v320 = vsel %vm135, %v314, %v315
    %v321 = vsel %vm135, %v313, %v314
    %v322 = vsel %vm135, %v312, %v313
    %v323 = vsel %vm135, %v311, %v312
    %v324 = vsel %vm135, %v310, %v311
    %v325 = vsel %vm135, %v317, %v310
    %v326 = vmul.f32 %v325, %v60
    %v327 = vmul.f32 %v324, %v61
    %v328 = vmul.f32 %v323, %v62
    %v329 = vmul.f32 %v322, %v63
    %v330 = vmul.f32 %v321, %v64
    %v331 = vmul.f32 %v320, %v65
    %v332 = vmul.f32 %v319, %v66
    %v333 = vmul.f32 %v318, %v67
    %vm334 = vcmask 130048
    %v336 = vsel %vm334, %v291, 0
    %v339 = vsel %vm334, %v292, 0
    %v342 = vsel %vm334, %v293, 0
    %v345 = vsel %vm334, %v294, 0
    %v348 = vsel %vm334, %v295, 0
    %v351 = vsel %vm334, %v296, 0
    %v354 = vsel %vm334, %v297, 0
    %v357 = vsel %vm334, %v298, 0
    %359 = vmatpush.msra.mxu0 0.0
    %360 = vmatpush.msra.mxu0 0.0
    %361 = vmatpush.msra.mxu0 0.0
    %362 = vmatpush.msra.mxu0 0.0
    %363 = vmatpush.msra.mxu0 0.0
    %364 = vmatpush.msra.mxu0 0.0
    %365 = vmatpush.msra.mxu0 0.0
    %366 = vmatpush.msra.mxu0 0.0
    %367 = vmatpush.msra.mxu0 0.0
    %368 = vmatpush.msra.mxu0 0.0
    %369 = vmatpush.msra.mxu0 0.0
    %370 = vmatpush.msra.mxu0 0.0
    %371 = vmatpush.msra.mxu0 0.0
    %372 = vmatpush.msra.mxu0 0.0
    %373 = vmatpush.msra.mxu0 %v302
    %374 = vmatpush.msra.mxu0 %v301
    %375 = vmatmul.f32.gmra.mxu0 %v336
    %v376 = vpop.f32.mrf.mxu0
    %v377 = vadd.f32 0.0, %v376
    %378 = vmatmul.f32.gmra.mxu0 %v339
    %v379 = vpop.f32.mrf.mxu0
    %v380 = vadd.f32 0.0, %v379
    %381 = vmatmul.f32.gmra.mxu0 %v342
    %v382 = vpop.f32.mrf.mxu0
    %v383 = vadd.f32 0.0, %v382
    %384 = vmatmul.f32.gmra.mxu0 %v345
    %v385 = vpop.f32.mrf.mxu0
    %v386 = vadd.f32 0.0, %v385
    %387 = vmatmul.f32.gmra.mxu0 %v348
    %v388 = vpop.f32.mrf.mxu0
    %v389 = vadd.f32 0.0, %v388
    %390 = vmatmul.f32.gmra.mxu0 %v351
    %v391 = vpop.f32.mrf.mxu0
    %v392 = vadd.f32 0.0, %v391
    %393 = vmatmul.f32.gmra.mxu0 %v354
    %v394 = vpop.f32.mrf.mxu0
    %v395 = vadd.f32 0.0, %v394
    %396 = vmatmul.f32.gmra.mxu0 %v357
    %v397 = vpop.f32.mrf.mxu0
    %v398 = vadd.f32 0.0, %v397
    %399 = vdwg.mxu0
    %v401 = vsel %vm334, %v326, 0
    %v404 = vsel %vm334, %v327, 0
    %v407 = vsel %vm334, %v328, 0
    %v410 = vsel %vm334, %v329, 0
    %v413 = vsel %vm334, %v330, 0
    %v416 = vsel %vm334, %v331, 0
    %v419 = vsel %vm334, %v332, 0
    %v422 = vsel %vm334, %v333, 0
    %424 = vmatpush.msra.mxu0 0.0
    %425 = vmatpush.msra.mxu0 0.0
    %426 = vmatpush.msra.mxu0 0.0
    %427 = vmatpush.msra.mxu0 0.0
    %428 = vmatpush.msra.mxu0 0.0
    %429 = vmatpush.msra.mxu0 0.0
    %430 = vmatpush.msra.mxu0 0.0
    %431 = vmatpush.msra.mxu0 0.0
    %432 = vmatpush.msra.mxu0 0.0
    %433 = vmatpush.msra.mxu0 0.0
    %434 = vmatpush.msra.mxu0 0.0
    %435 = vmatpush.msra.mxu0 0.0
    %436 = vmatpush.msra.mxu0 0.0
    %437 = vmatpush.msra.mxu0 0.0
    %438 = vmatpush.msra.mxu0 %v300
    %439 = vmatpush.msra.mxu0 %v299
    %440 = vmatmul.f32.gmra.mxu0 %v401
    %v441 = vpop.f32.mrf.mxu0
    %v442 = vadd.f32 %v377, %v441
    %443 = vmatmul.f32.gmra.mxu0 %v404
    %v444 = vpop.f32.mrf.mxu0
    %v445 = vadd.f32 %v380, %v444
    %446 = vmatmul.f32.gmra.mxu0 %v407
    %v447 = vpop.f32.mrf.mxu0
    %v448 = vadd.f32 %v383, %v447
    %449 = vmatmul.f32.gmra.mxu0 %v410
    %v450 = vpop.f32.mrf.mxu0
    %v451 = vadd.f32 %v386, %v450
    %452 = vmatmul.f32.gmra.mxu0 %v413
    %v453 = vpop.f32.mrf.mxu0
    %v454 = vadd.f32 %v389, %v453
    %455 = vmatmul.f32.gmra.mxu0 %v416
    %v456 = vpop.f32.mrf.mxu0
    %v457 = vadd.f32 %v392, %v456
    %458 = vmatmul.f32.gmra.mxu0 %v419
    %v459 = vpop.f32.mrf.mxu0
    %v460 = vadd.f32 %v395, %v459
    %461 = vmatmul.f32.gmra.mxu0 %v422
    %v462 = vpop.f32.mrf.mxu0
    %v463 = vadd.f32 %v398, %v462
    %464 = vdwg.mxu0
    %v465 = vperm.slane %v303, 0
    %v466 = vadd.f32 %v442, %v465
    %v467 = vadd.f32 %v445, %v465
    %v468 = vadd.f32 %v448, %v465
    %v469 = vadd.f32 %v451, %v465
    %v470 = vadd.f32 %v454, %v465
    %v471 = vadd.f32 %v457, %v465
    %v472 = vadd.f32 %v460, %v465
    %v473 = vadd.f32 %v463, %v465
    %v474 = vmax.f32 %v466, 0.0
    %v475 = vmax.f32 %v467, 0.0
    %v476 = vmax.f32 %v468, 0.0
    %v477 = vmax.f32 %v469, 0.0
    %v478 = vmax.f32 %v470, 0.0
    %v479 = vmax.f32 %v471, 0.0
    %v480 = vmax.f32 %v472, 0.0
    %v481 = vmax.f32 %v473, 0.0
    %v482 = vperm.slane %v306, 0
    %v484 = vsel %vm334, %v474, 0
    %v487 = vsel %vm334, %v475, 0
    %v490 = vsel %vm334, %v476, 0
    %v493 = vsel %vm334, %v477, 0
    %v496 = vsel %vm334, %v478, 0
    %v499 = vsel %vm334, %v479, 0
    %v502 = vsel %vm334, %v480, 0
    %v505 = vsel %vm334, %v481, 0
    %507 = vmatpush.msra.mxu0 0.0
    %508 = vmatpush.msra.mxu0 0.0
    %509 = vmatpush.msra.mxu0 0.0
    %510 = vmatpush.msra.mxu0 0.0
    %511 = vmatpush.msra.mxu0 0.0
    %512 = vmatpush.msra.mxu0 0.0
    %513 = vmatpush.msra.mxu0 0.0
    %514 = vmatpush.msra.mxu0 0.0
    %515 = vmatpush.msra.mxu0 0.0
    %516 = vmatpush.msra.mxu0 0.0
    %517 = vmatpush.msra.mxu0 0.0
    %518 = vmatpush.msra.mxu0 0.0
    %519 = vmatpush.msra.mxu0 0.0
    %520 = vmatpush.msra.mxu0 0.0
    %521 = vmatpush.msra.mxu0 %v305
    %522 = vmatpush.msra.mxu0 %v304
    %523 = vmatmul.f32.gmra.mxu0 %v484
    %v524 = vpop.f32.mrf.mxu0
    %v525 = vadd.f32 %v482, %v524
    %526 = vmatmul.f32.gmra.mxu0 %v487
    %v527 = vpop.f32.mrf.mxu0
    %v528 = vadd.f32 %v482, %v527
    %529 = vmatmul.f32.gmra.mxu0 %v490
    %v530 = vpop.f32.mrf.mxu0
    %v531 = vadd.f32 %v482, %v530
    %532 = vmatmul.f32.gmra.mxu0 %v493
    %v533 = vpop.f32.mrf.mxu0
    %v534 = vadd.f32 %v482, %v533
    %535 = vmatmul.f32.gmra.mxu0 %v496
    %v536 = vpop.f32.mrf.mxu0
    %v537 = vadd.f32 %v482, %v536
    %538 = vmatmul.f32.gmra.mxu0 %v499
    %v539 = vpop.f32.mrf.mxu0
    %v540 = vadd.f32 %v482, %v539
    %541 = vmatmul.f32.gmra.mxu0 %v502
    %v542 = vpop.f32.mrf.mxu0
    %v543 = vadd.f32 %v482, %v542
    %544 = vmatmul.f32.gmra.mxu0 %v505
    %v545 = vpop.f32.mrf.mxu0
    %v546 = vadd.f32 %v482, %v545
    %547 = vdwg.mxu0
    %v548 = vperm.slane %v309, 0
    %549 = vmatpush.msra.mxu0 0.0
    %550 = vmatpush.msra.mxu0 0.0
    %551 = vmatpush.msra.mxu0 0.0
    %552 = vmatpush.msra.mxu0 0.0
    %553 = vmatpush.msra.mxu0 0.0
    %554 = vmatpush.msra.mxu0 0.0
    %555 = vmatpush.msra.mxu0 0.0
    %556 = vmatpush.msra.mxu0 0.0
    %557 = vmatpush.msra.mxu0 0.0
    %558 = vmatpush.msra.mxu0 0.0
    %559 = vmatpush.msra.mxu0 0.0
    %560 = vmatpush.msra.mxu0 0.0
    %561 = vmatpush.msra.mxu0 0.0
    %562 = vmatpush.msra.mxu0 0.0
    %563 = vmatpush.msra.mxu0 %v308
    %564 = vmatpush.msra.mxu0 %v307
    %565 = vmatmul.f32.gmra.mxu0 %v484
    %v566 = vpop.f32.mrf.mxu0
    %v567 = vadd.f32 %v548, %v566
    %568 = vmatmul.f32.gmra.mxu0 %v487
    %v569 = vpop.f32.mrf.mxu0
    %v570 = vadd.f32 %v548, %v569
    %571 = vmatmul.f32.gmra.mxu0 %v490
    %v572 = vpop.f32.mrf.mxu0
    %v573 = vadd.f32 %v548, %v572
    %574 = vmatmul.f32.gmra.mxu0 %v493
    %v575 = vpop.f32.mrf.mxu0
    %v576 = vadd.f32 %v548, %v575
    %577 = vmatmul.f32.gmra.mxu0 %v496
    %v578 = vpop.f32.mrf.mxu0
    %v579 = vadd.f32 %v548, %v578
    %580 = vmatmul.f32.gmra.mxu0 %v499
    %v581 = vpop.f32.mrf.mxu0
    %v582 = vadd.f32 %v548, %v581
    %583 = vmatmul.f32.gmra.mxu0 %v502
    %v584 = vpop.f32.mrf.mxu0
    %v585 = vadd.f32 %v548, %v584
    %586 = vmatmul.f32.gmra.mxu0 %v505
    %v587 = vpop.f32.mrf.mxu0
    %v588 = vadd.f32 %v548, %v587
    %589 = vdwg.mxu0
    %v590 = vadd.f32 %v567, %v291
    %v591 = vadd.f32 %v570, %v292
    %v592 = vadd.f32 %v573, %v293
    %v593 = vadd.f32 %v576, %v294
    %v594 = vadd.f32 %v579, %v295
    %v595 = vadd.f32 %v582, %v296
    %v596 = vadd.f32 %v585, %v297
    %v597 = vadd.f32 %v588, %v298
    %v598 = vld [vmem:[#allocation2 + $0x70] sm:$0xff]
    %v599 = vld [vmem:[#allocation2 + $0x78] sm:$0xff]
    %v600 = vld [vmem:[#allocation2 + $0x80] sm:$0xff]
    %v601 = vld [vmem:[#allocation2 + $0x88] sm:$0xff]
    %v602 = vld [vmem:[#allocation2 + $0x90] sm:$0x1]
    %v603 = vld [vmem:[#allocation2 + $0x98] sm:$0xff]
    %v604 = vld [vmem:[#allocation2 + $0xa0] sm:$0xff]
    %v605 = vld [vmem:[#allocation2 + $0xa8] sm:$0x1]
    %v606 = vld [vmem:[#allocation2 + $0xb0] sm:$0xff]
    %v607 = vld [vmem:[#allocation2 + $0xb8] sm:$0xff]
    %v608 = vld [vmem:[#allocation2 + $0xc0] sm:$0x1]
    %v609 = vrot.slane %v590, 6
    %v610 = vrot.slane %v591, 6
    %v611 = vrot.slane %v592, 6
    %v612 = vrot.slane %v593, 6
    %v613 = vrot.slane %v594, 6
    %v614 = vrot.slane %v595, 6
    %v615 = vrot.slane %v596, 6
    %v616 = vrot.slane %v597, 6
    %vm617 = vcmp.lt.s32.totalorder %v28, 2
    %v618 = vsel %vm617, %v615, %v616
    %v619 = vsel %vm617, %v614, %v615
    %v620 = vsel %vm617, %v613, %v614
    %v621 = vsel %vm617, %v612, %v613
    %v622 = vsel %vm617, %v611, %v612
    %v623 = vsel %vm617, %v610, %v611
    %v624 = vsel %vm617, %v609, %v610
    %v625 = vsel %vm617, %v616, %v609
    %v626 = vmul.f32 %v625, %v84
    %v627 = vmul.f32 %v624, %v85
    %v628 = vmul.f32 %v623, %v86
    %v629 = vmul.f32 %v622, %v87
    %v630 = vmul.f32 %v621, %v88
    %v631 = vmul.f32 %v620, %v89
    %v632 = vmul.f32 %v619, %v90
    %v633 = vmul.f32 %v618, %v91
    %v635 = vsel %vm334, %v590, 0
    %v638 = vsel %vm334, %v591, 0
    %v641 = vsel %vm334, %v592, 0
    %v644 = vsel %vm334, %v593, 0
    %v647 = vsel %vm334, %v594, 0
    %v650 = vsel %vm334, %v595, 0
    %v653 = vsel %vm334, %v596, 0
    %v656 = vsel %vm334, %v597, 0
    %658 = vmatpush.msra.mxu0 0.0
    %659 = vmatpush.msra.mxu0 0.0
    %660 = vmatpush.msra.mxu0 0.0
    %661 = vmatpush.msra.mxu0 0.0
    %662 = vmatpush.msra.mxu0 0.0
    %663 = vmatpush.msra.mxu0 0.0
    %664 = vmatpush.msra.mxu0 0.0
    %665 = vmatpush.msra.mxu0 0.0
    %666 = vmatpush.msra.mxu0 0.0
    %667 = vmatpush.msra.mxu0 0.0
    %668 = vmatpush.msra.mxu0 0.0
    %669 = vmatpush.msra.mxu0 0.0
    %670 = vmatpush.msra.mxu0 0.0
    %671 = vmatpush.msra.mxu0 0.0
    %672 = vmatpush.msra.mxu0 %v601
    %673 = vmatpush.msra.mxu0 %v600
    %674 = vmatmul.f32.gmra.mxu0 %v635
    %v675 = vpop.f32.mrf.mxu0
    %v676 = vadd.f32 0.0, %v675
    %677 = vmatmul.f32.gmra.mxu0 %v638
    %v678 = vpop.f32.mrf.mxu0
    %v679 = vadd.f32 0.0, %v678
    %680 = vmatmul.f32.gmra.mxu0 %v641
    %v681 = vpop.f32.mrf.mxu0
    %v682 = vadd.f32 0.0, %v681
    %683 = vmatmul.f32.gmra.mxu0 %v644
    %v684 = vpop.f32.mrf.mxu0
    %v685 = vadd.f32 0.0, %v684
    %686 = vmatmul.f32.gmra.mxu0 %v647
    %v687 = vpop.f32.mrf.mxu0
    %v688 = vadd.f32 0.0, %v687
    %689 = vmatmul.f32.gmra.mxu0 %v650
    %v690 = vpop.f32.mrf.mxu0
    %v691 = vadd.f32 0.0, %v690
    %692 = vmatmul.f32.gmra.mxu0 %v653
    %v693 = vpop.f32.mrf.mxu0
    %v694 = vadd.f32 0.0, %v693
    %695 = vmatmul.f32.gmra.mxu0 %v656
    %v696 = vpop.f32.mrf.mxu0
    %v697 = vadd.f32 0.0, %v696
    %698 = vdwg.mxu0
    %v700 = vsel %vm334, %v626, 0
    %v703 = vsel %vm334, %v627, 0
    %v706 = vsel %vm334, %v628, 0
    %v709 = vsel %vm334, %v629, 0
    %v712 = vsel %vm334, %v630, 0
    %v715 = vsel %vm334, %v631, 0
    %v718 = vsel %vm334, %v632, 0
    %v721 = vsel %vm334, %v633, 0
    %723 = vmatpush.msra.mxu0 0.0
    %724 = vmatpush.msra.mxu0 0.0
    %725 = vmatpush.msra.mxu0 0.0
    %726 = vmatpush.msra.mxu0 0.0
    %727 = vmatpush.msra.mxu0 0.0
    %728 = vmatpush.msra.mxu0 0.0
    %729 = vmatpush.msra.mxu0 0.0
    %730 = vmatpush.msra.mxu0 0.0
    %731 = vmatpush.msra.mxu0 0.0
    %732 = vmatpush.msra.mxu0 0.0
    %733 = vmatpush.msra.mxu0 0.0
    %734 = vmatpush.msra.mxu0 0.0
    %735 = vmatpush.msra.mxu0 0.0
    %736 = vmatpush.msra.mxu0 0.0
    %737 = vmatpush.msra.mxu0 %v599
    %738 = vmatpush.msra.mxu0 %v598
    %739 = vmatmul.f32.gmra.mxu0 %v700
    %v740 = vpop.f32.mrf.mxu0
    %v741 = vadd.f32 %v676, %v740
    %742 = vmatmul.f32.gmra.mxu0 %v703
    %v743 = vpop.f32.mrf.mxu0
    %v744 = vadd.f32 %v679, %v743
    %745 = vmatmul.f32.gmra.mxu0 %v706
    %v746 = vpop.f32.mrf.mxu0
    %v747 = vadd.f32 %v682, %v746
    %748 = vmatmul.f32.gmra.mxu0 %v709
    %v749 = vpop.f32.mrf.mxu0
    %v750 = vadd.f32 %v685, %v749
    %751 = vmatmul.f32.gmra.mxu0 %v712
    %v752 = vpop.f32.mrf.mxu0
    %v753 = vadd.f32 %v688, %v752
    %754 = vmatmul.f32.gmra.mxu0 %v715
    %v755 = vpop.f32.mrf.mxu0
    %v756 = vadd.f32 %v691, %v755
    %757 = vmatmul.f32.gmra.mxu0 %v718
    %v758 = vpop.f32.mrf.mxu0
    %v759 = vadd.f32 %v694, %v758
    %760 = vmatmul.f32.gmra.mxu0 %v721
    %v761 = vpop.f32.mrf.mxu0
    %v762 = vadd.f32 %v697, %v761
    %763 = vdwg.mxu0
    %v764 = vperm.slane %v602, 0
    %v765 = vadd.f32 %v741, %v764
    %v766 = vadd.f32 %v744, %v764
    %v767 = vadd.f32 %v747, %v764
    %v768 = vadd.f32 %v750, %v764
    %v769 = vadd.f32 %v753, %v764
    %v770 = vadd.f32 %v756, %v764
    %v771 = vadd.f32 %v759, %v764
    %v772 = vadd.f32 %v762, %v764
    %v773 = vmax.f32 %v765, 0.0
    %v774 = vmax.f32 %v766, 0.0
    %v775 = vmax.f32 %v767, 0.0
    %v776 = vmax.f32 %v768, 0.0
    %v777 = vmax.f32 %v769, 0.0
    %v778 = vmax.f32 %v770, 0.0
    %v779 = vmax.f32 %v771, 0.0
    %v780 = vmax.f32 %v772, 0.0
    %v782 = vsel %vm334, %v773, 0
    %v785 = vsel %vm334, %v774, 0
    %v788 = vsel %vm334, %v775, 0
    %v791 = vsel %vm334, %v776, 0
    %v794 = vsel %vm334, %v777, 0
    %v797 = vsel %vm334, %v778, 0
    %v800 = vsel %vm334, %v779, 0
    %v803 = vsel %vm334, %v780, 0
    %805 = vmatpush.msra.mxu0 0.0
    %806 = vmatpush.msra.mxu0 0.0
    %807 = vmatpush.msra.mxu0 0.0
    %808 = vmatpush.msra.mxu0 0.0
    %809 = vmatpush.msra.mxu0 0.0
    %810 = vmatpush.msra.mxu0 0.0
    %811 = vmatpush.msra.mxu0 0.0
    %812 = vmatpush.msra.mxu0 0.0
    %813 = vmatpush.msra.mxu0 0.0
    %814 = vmatpush.msra.mxu0 0.0
    %815 = vmatpush.msra.mxu0 0.0
    %816 = vmatpush.msra.mxu0 0.0
    %817 = vmatpush.msra.mxu0 0.0
    %818 = vmatpush.msra.mxu0 0.0
    %819 = vmatpush.msra.mxu0 %v604
    %820 = vmatpush.msra.mxu0 %v603
    %821 = vmatmul.f32.gmra.mxu0 %v782
    %v822 = vpop.f32.mrf.mxu0
    %v823 = vadd.f32 0.0, %v822
    %824 = vmatmul.f32.gmra.mxu0 %v785
    %v825 = vpop.f32.mrf.mxu0
    %v826 = vadd.f32 0.0, %v825
    %827 = vmatmul.f32.gmra.mxu0 %v788
    %v828 = vpop.f32.mrf.mxu0
    %v829 = vadd.f32 0.0, %v828
    %830 = vmatmul.f32.gmra.mxu0 %v791
    %v831 = vpop.f32.mrf.mxu0
    %v832 = vadd.f32 0.0, %v831
    %833 = vmatmul.f32.gmra.mxu0 %v794
    %v834 = vpop.f32.mrf.mxu0
    %v835 = vadd.f32 0.0, %v834
    %836 = vmatmul.f32.gmra.mxu0 %v797
    %v837 = vpop.f32.mrf.mxu0
    %v838 = vadd.f32 0.0, %v837
    %839 = vmatmul.f32.gmra.mxu0 %v800
    %v840 = vpop.f32.mrf.mxu0
    %v841 = vadd.f32 0.0, %v840
    %842 = vmatmul.f32.gmra.mxu0 %v803
    %v843 = vpop.f32.mrf.mxu0
    %v844 = vadd.f32 0.0, %v843
    %845 = vdwg.mxu0
    %v846 = vadd.f32 %v525, %v823
    %v847 = vadd.f32 %v528, %v826
    %v848 = vadd.f32 %v531, %v829
    %v849 = vadd.f32 %v534, %v832
    %v850 = vadd.f32 %v537, %v835
    %v851 = vadd.f32 %v540, %v838
    %v852 = vadd.f32 %v543, %v841
    %v853 = vadd.f32 %v546, %v844
    %v854 = vperm.slane %v605, 0
    %v855 = vadd.f32 %v846, %v854
    %v856 = vadd.f32 %v847, %v854
    %v857 = vadd.f32 %v848, %v854
    %v858 = vadd.f32 %v849, %v854
    %v859 = vadd.f32 %v850, %v854
    %v860 = vadd.f32 %v851, %v854
    %v861 = vadd.f32 %v852, %v854
    %v862 = vadd.f32 %v853, %v854
    %v863 = vperm.slane %v608, 0
    %864 = vmatpush.msra.mxu0 0.0
    %865 = vmatpush.msra.mxu0 0.0
    %866 = vmatpush.msra.mxu0 0.0
    %867 = vmatpush.msra.mxu0 0.0
    %868 = vmatpush.msra.mxu0 0.0
    %869 = vmatpush.msra.mxu0 0.0
    %870 = vmatpush.msra.mxu0 0.0
    %871 = vmatpush.msra.mxu0 0.0
    %872 = vmatpush.msra.mxu0 0.0
    %873 = vmatpush.msra.mxu0 0.0
    %874 = vmatpush.msra.mxu0 0.0
    %875 = vmatpush.msra.mxu0 0.0
    %876 = vmatpush.msra.mxu0 0.0
    %877 = vmatpush.msra.mxu0 0.0
    %878 = vmatpush.msra.mxu0 %v607
    %879 = vmatpush.msra.mxu0 %v606
    %880 = vmatmul.f32.gmra.mxu0 %v782
    %v881 = vpop.f32.mrf.mxu0
    %v882 = vadd.f32 %v863, %v881
    %883 = vmatmul.f32.gmra.mxu0 %v785
    %v884 = vpop.f32.mrf.mxu0
    %v885 = vadd.f32 %v863, %v884
    %886 = vmatmul.f32.gmra.mxu0 %v788
    %v887 = vpop.f32.mrf.mxu0
    %v888 = vadd.f32 %v863, %v887
    %889 = vmatmul.f32.gmra.mxu0 %v791
    %v890 = vpop.f32.mrf.mxu0
    %v891 = vadd.f32 %v863, %v890
    %892 = vmatmul.f32.gmra.mxu0 %v794
    %v893 = vpop.f32.mrf.mxu0
    %v894 = vadd.f32 %v863, %v893
    %895 = vmatmul.f32.gmra.mxu0 %v797
    %v896 = vpop.f32.mrf.mxu0
    %v897 = vadd.f32 %v863, %v896
    %898 = vmatmul.f32.gmra.mxu0 %v800
    %v899 = vpop.f32.mrf.mxu0
    %v900 = vadd.f32 %v863, %v899
    %901 = vmatmul.f32.gmra.mxu0 %v803
    %v902 = vpop.f32.mrf.mxu0
    %v903 = vadd.f32 %v863, %v902
    %904 = vdwg.mxu0
    %v905 = vadd.f32 %v882, %v590
    %v906 = vadd.f32 %v885, %v591
    %v907 = vadd.f32 %v888, %v592
    %v908 = vadd.f32 %v891, %v593
    %v909 = vadd.f32 %v894, %v594
    %v910 = vadd.f32 %v897, %v595
    %v911 = vadd.f32 %v900, %v596
    %v912 = vadd.f32 %v903, %v597
    %v913 = vld [vmem:[#allocation2 + $0xc8] sm:$0xff]
    %v914 = vld [vmem:[#allocation2 + $0xd0] sm:$0xff]
    %v915 = vld [vmem:[#allocation2 + $0xd8] sm:$0xff]
    %v916 = vld [vmem:[#allocation2 + $0xe0] sm:$0xff]
    %v917 = vld [vmem:[#allocation2 + $0xe8] sm:$0x1]
    %v918 = vld [vmem:[#allocation2 + $0xf0] sm:$0xff]
    %v919 = vld [vmem:[#allocation2 + $0xf8] sm:$0xff]
    %v920 = vld [vmem:[#allocation2 + $0x100] sm:$0x1]
    %v921 = vld [vmem:[#allocation2 + $0x108] sm:$0xff]
    %v922 = vld [vmem:[#allocation2 + $0x110] sm:$0xff]
    %v923 = vld [vmem:[#allocation2 + $0x118] sm:$0x1]
    %v924 = vrot.slane %v905, 4
    %v925 = vrot.slane %v906, 4
    %v926 = vrot.slane %v907, 4
    %v927 = vrot.slane %v908, 4
    %v928 = vrot.slane %v909, 4
    %v929 = vrot.slane %v910, 4
    %v930 = vrot.slane %v911, 4
    %v931 = vrot.slane %v912, 4
    %vm932 = vcmp.lt.s32.totalorder %v28, 4
    %v933 = vsel %vm932, %v930, %v931
    %v934 = vsel %vm932, %v929, %v930
    %v935 = vsel %vm932, %v928, %v929
    %v936 = vsel %vm932, %v927, %v928
    %v937 = vsel %vm932, %v926, %v927
    %v938 = vsel %vm932, %v925, %v926
    %v939 = vsel %vm932, %v924, %v925
    %v940 = vsel %vm932, %v931, %v924
    %v941 = vmul.f32 %v940, %v108
    %v942 = vmul.f32 %v939, %v109
    %v943 = vmul.f32 %v938, %v110
    %v944 = vmul.f32 %v937, %v111
    %v945 = vmul.f32 %v936, %v112
    %v946 = vmul.f32 %v935, %v113
    %v947 = vmul.f32 %v934, %v114
    %v948 = vmul.f32 %v933, %v115
    %v950 = vsel %vm334, %v905, 0
    %v953 = vsel %vm334, %v906, 0
    %v956 = vsel %vm334, %v907, 0
    %v959 = vsel %vm334, %v908, 0
    %v962 = vsel %vm334, %v909, 0
    %v965 = vsel %vm334, %v910, 0
    %v968 = vsel %vm334, %v911, 0
    %v971 = vsel %vm334, %v912, 0
    %973 = vmatpush.msra.mxu0 0.0
    %974 = vmatpush.msra.mxu0 0.0
    %975 = vmatpush.msra.mxu0 0.0
    %976 = vmatpush.msra.mxu0 0.0
    %977 = vmatpush.msra.mxu0 0.0
    %978 = vmatpush.msra.mxu0 0.0
    %979 = vmatpush.msra.mxu0 0.0
    %980 = vmatpush.msra.mxu0 0.0
    %981 = vmatpush.msra.mxu0 0.0
    %982 = vmatpush.msra.mxu0 0.0
    %983 = vmatpush.msra.mxu0 0.0
    %984 = vmatpush.msra.mxu0 0.0
    %985 = vmatpush.msra.mxu0 0.0
    %986 = vmatpush.msra.mxu0 0.0
    %987 = vmatpush.msra.mxu0 %v916
    %988 = vmatpush.msra.mxu0 %v915
    %989 = vmatmul.f32.gmra.mxu0 %v950
    %v990 = vpop.f32.mrf.mxu0
    %v991 = vadd.f32 0.0, %v990
    %992 = vmatmul.f32.gmra.mxu0 %v953
    %v993 = vpop.f32.mrf.mxu0
    %v994 = vadd.f32 0.0, %v993
    %995 = vmatmul.f32.gmra.mxu0 %v956
    %v996 = vpop.f32.mrf.mxu0
    %v997 = vadd.f32 0.0, %v996
    %998 = vmatmul.f32.gmra.mxu0 %v959
    %v999 = vpop.f32.mrf.mxu0
    %v1000 = vadd.f32 0.0, %v999
    %1001 = vmatmul.f32.gmra.mxu0 %v962
    %v1002 = vpop.f32.mrf.mxu0
    %v1003 = vadd.f32 0.0, %v1002
    %1004 = vmatmul.f32.gmra.mxu0 %v965
    %v1005 = vpop.f32.mrf.mxu0
    %v1006 = vadd.f32 0.0, %v1005
    %1007 = vmatmul.f32.gmra.mxu0 %v968
    %v1008 = vpop.f32.mrf.mxu0
    %v1009 = vadd.f32 0.0, %v1008
    %1010 = vmatmul.f32.gmra.mxu0 %v971
    %v1011 = vpop.f32.mrf.mxu0
    %v1012 = vadd.f32 0.0, %v1011
    %1013 = vdwg.mxu0
    %v1015 = vsel %vm334, %v941, 0
    %v1018 = vsel %vm334, %v942, 0
    %v1021 = vsel %vm334, %v943, 0
    %v1024 = vsel %vm334, %v944, 0
    %v1027 = vsel %vm334, %v945, 0
    %v1030 = vsel %vm334, %v946, 0
    %v1033 = vsel %vm334, %v947, 0
    %v1036 = vsel %vm334, %v948, 0
    %1038 = vmatpush.msra.mxu0 0.0
    %1039 = vmatpush.msra.mxu0 0.0
    %1040 = vmatpush.msra.mxu0 0.0
    %1041 = vmatpush.msra.mxu0 0.0
    %1042 = vmatpush.msra.mxu0 0.0
    %1043 = vmatpush.msra.mxu0 0.0
    %1044 = vmatpush.msra.mxu0 0.0
    %1045 = vmatpush.msra.mxu0 0.0
    %1046 = vmatpush.msra.mxu0 0.0
    %1047 = vmatpush.msra.mxu0 0.0
    %1048 = vmatpush.msra.mxu0 0.0
    %1049 = vmatpush.msra.mxu0 0.0
    %1050 = vmatpush.msra.mxu0 0.0
    %1051 = vmatpush.msra.mxu0 0.0
    %1052 = vmatpush.msra.mxu0 %v914
    %1053 = vmatpush.msra.mxu0 %v913
    %1054 = vmatmul.f32.gmra.mxu0 %v1015
    %v1055 = vpop.f32.mrf.mxu0
    %v1056 = vadd.f32 %v991, %v1055
    %1057 = vmatmul.f32.gmra.mxu0 %v1018
    %v1058 = vpop.f32.mrf.mxu0
    %v1059 = vadd.f32 %v994, %v1058
    %1060 = vmatmul.f32.gmra.mxu0 %v1021
    %v1061 = vpop.f32.mrf.mxu0
    %v1062 = vadd.f32 %v997, %v1061
    %1063 = vmatmul.f32.gmra.mxu0 %v1024
    %v1064 = vpop.f32.mrf.mxu0
    %v1065 = vadd.f32 %v1000, %v1064
    %1066 = vmatmul.f32.gmra.mxu0 %v1027
    %v1067 = vpop.f32.mrf.mxu0
    %v1068 = vadd.f32 %v1003, %v1067
    %1069 = vmatmul.f32.gmra.mxu0 %v1030
    %v1070 = vpop.f32.mrf.mxu0
    %v1071 = vadd.f32 %v1006, %v1070
    %1072 = vmatmul.f32.gmra.mxu0 %v1033
    %v1073 = vpop.f32.mrf.mxu0
    %v1074 = vadd.f32 %v1009, %v1073
    %1075 = vmatmul.f32.gmra.mxu0 %v1036
    %v1076 = vpop.f32.mrf.mxu0
    %v1077 = vadd.f32 %v1012, %v1076
    %1078 = vdwg.mxu0
    %v1079 = vperm.slane %v917, 0
    %v1080 = vadd.f32 %v1056, %v1079
    %v1081 = vadd.f32 %v1059, %v1079
    %v1082 = vadd.f32 %v1062, %v1079
    %v1083 = vadd.f32 %v1065, %v1079
    %v1084 = vadd.f32 %v1068, %v1079
    %v1085 = vadd.f32 %v1071, %v1079
    %v1086 = vadd.f32 %v1074, %v1079
    %v1087 = vadd.f32 %v1077, %v1079
    %v1088 = vmax.f32 %v1080, 0.0
    %v1089 = vmax.f32 %v1081, 0.0
    %v1090 = vmax.f32 %v1082, 0.0
    %v1091 = vmax.f32 %v1083, 0.0
    %v1092 = vmax.f32 %v1084, 0.0
    %v1093 = vmax.f32 %v1085, 0.0
    %v1094 = vmax.f32 %v1086, 0.0
    %v1095 = vmax.f32 %v1087, 0.0
    %v1097 = vsel %vm334, %v1088, 0
    %v1100 = vsel %vm334, %v1089, 0
    %v1103 = vsel %vm334, %v1090, 0
    %v1106 = vsel %vm334, %v1091, 0
    %v1109 = vsel %vm334, %v1092, 0
    %v1112 = vsel %vm334, %v1093, 0
    %v1115 = vsel %vm334, %v1094, 0
    %v1118 = vsel %vm334, %v1095, 0
    %1120 = vmatpush.msra.mxu0 0.0
    %1121 = vmatpush.msra.mxu0 0.0
    %1122 = vmatpush.msra.mxu0 0.0
    %1123 = vmatpush.msra.mxu0 0.0
    %1124 = vmatpush.msra.mxu0 0.0
    %1125 = vmatpush.msra.mxu0 0.0
    %1126 = vmatpush.msra.mxu0 0.0
    %1127 = vmatpush.msra.mxu0 0.0
    %1128 = vmatpush.msra.mxu0 0.0
    %1129 = vmatpush.msra.mxu0 0.0
    %1130 = vmatpush.msra.mxu0 0.0
    %1131 = vmatpush.msra.mxu0 0.0
    %1132 = vmatpush.msra.mxu0 0.0
    %1133 = vmatpush.msra.mxu0 0.0
    %1134 = vmatpush.msra.mxu0 %v919
    %1135 = vmatpush.msra.mxu0 %v918
    %1136 = vmatmul.f32.gmra.mxu0 %v1097
    %v1137 = vpop.f32.mrf.mxu0
    %v1138 = vadd.f32 0.0, %v1137
    %1139 = vmatmul.f32.gmra.mxu0 %v1100
    %v1140 = vpop.f32.mrf.mxu0
    %v1141 = vadd.f32 0.0, %v1140
    %1142 = vmatmul.f32.gmra.mxu0 %v1103
    %v1143 = vpop.f32.mrf.mxu0
    %v1144 = vadd.f32 0.0, %v1143
    %1145 = vmatmul.f32.gmra.mxu0 %v1106
    %v1146 = vpop.f32.mrf.mxu0
    %v1147 = vadd.f32 0.0, %v1146
    %1148 = vmatmul.f32.gmra.mxu0 %v1109
    %v1149 = vpop.f32.mrf.mxu0
    %v1150 = vadd.f32 0.0, %v1149
    %1151 = vmatmul.f32.gmra.mxu0 %v1112
    %v1152 = vpop.f32.mrf.mxu0
    %v1153 = vadd.f32 0.0, %v1152
    %1154 = vmatmul.f32.gmra.mxu0 %v1115
    %v1155 = vpop.f32.mrf.mxu0
    %v1156 = vadd.f32 0.0, %v1155
    %1157 = vmatmul.f32.gmra.mxu0 %v1118
    %v1158 = vpop.f32.mrf.mxu0
    %v1159 = vadd.f32 0.0, %v1158
    %1160 = vdwg.mxu0
    %v1161 = vadd.f32 %v855, %v1138
    %v1162 = vadd.f32 %v856, %v1141
    %v1163 = vadd.f32 %v857, %v1144
    %v1164 = vadd.f32 %v858, %v1147
    %v1165 = vadd.f32 %v859, %v1150
    %v1166 = vadd.f32 %v860, %v1153
    %v1167 = vadd.f32 %v861, %v1156
    %v1168 = vadd.f32 %v862, %v1159
    %v1169 = vperm.slane %v920, 0
    %v1170 = vadd.f32 %v1161, %v1169
    %v1171 = vadd.f32 %v1162, %v1169
    %v1172 = vadd.f32 %v1163, %v1169
    %v1173 = vadd.f32 %v1164, %v1169
    %v1174 = vadd.f32 %v1165, %v1169
    %v1175 = vadd.f32 %v1166, %v1169
    %v1176 = vadd.f32 %v1167, %v1169
    %v1177 = vadd.f32 %v1168, %v1169
    %v1178 = vperm.slane %v923, 0
    %1179 = vmatpush.msra.mxu0 0.0
    %1180 = vmatpush.msra.mxu0 0.0
    %1181 = vmatpush.msra.mxu0 0.0
    %1182 = vmatpush.msra.mxu0 0.0
    %1183 = vmatpush.msra.mxu0 0.0
    %1184 = vmatpush.msra.mxu0 0.0
    %1185 = vmatpush.msra.mxu0 0.0
    %1186 = vmatpush.msra.mxu0 0.0
    %1187 = vmatpush.msra.mxu0 0.0
    %1188 = vmatpush.msra.mxu0 0.0
    %1189 = vmatpush.msra.mxu0 0.0
    %1190 = vmatpush.msra.mxu0 0.0
    %1191 = vmatpush.msra.mxu0 0.0
    %1192 = vmatpush.msra.mxu0 0.0
    %1193 = vmatpush.msra.mxu0 %v922
    %1194 = vmatpush.msra.mxu0 %v921
    %1195 = vmatmul.f32.gmra.mxu0 %v1097
    %v1196 = vpop.f32.mrf.mxu0
    %v1197 = vadd.f32 %v1178, %v1196
    %1198 = vmatmul.f32.gmra.mxu0 %v1100
    %v1199 = vpop.f32.mrf.mxu0
    %v1200 = vadd.f32 %v1178, %v1199
    %1201 = vmatmul.f32.gmra.mxu0 %v1103
    %v1202 = vpop.f32.mrf.mxu0
    %v1203 = vadd.f32 %v1178, %v1202
    %1204 = vmatmul.f32.gmra.mxu0 %v1106
    %v1205 = vpop.f32.mrf.mxu0
    %v1206 = vadd.f32 %v1178, %v1205
    %1207 = vmatmul.f32.gmra.mxu0 %v1109
    %v1208 = vpop.f32.mrf.mxu0
    %v1209 = vadd.f32 %v1178, %v1208
    %1210 = vmatmul.f32.gmra.mxu0 %v1112
    %v1211 = vpop.f32.mrf.mxu0
    %v1212 = vadd.f32 %v1178, %v1211
    %1213 = vmatmul.f32.gmra.mxu0 %v1115
    %v1214 = vpop.f32.mrf.mxu0
    %v1215 = vadd.f32 %v1178, %v1214
    %1216 = vmatmul.f32.gmra.mxu0 %v1118
    %v1217 = vpop.f32.mrf.mxu0
    %v1218 = vadd.f32 %v1178, %v1217
    %1219 = vdwg.mxu0
    %v1220 = vadd.f32 %v1197, %v905
    %v1221 = vadd.f32 %v1200, %v906
    %v1222 = vadd.f32 %v1203, %v907
    %v1223 = vadd.f32 %v1206, %v908
    %v1224 = vadd.f32 %v1209, %v909
    %v1225 = vadd.f32 %v1212, %v910
    %v1226 = vadd.f32 %v1215, %v911
    %v1227 = vadd.f32 %v1218, %v912
    %v1228 = vld [vmem:[#allocation2 + $0x120] sm:$0xff]
    %v1229 = vld [vmem:[#allocation2 + $0x128] sm:$0xff]
    %v1230 = vld [vmem:[#allocation2 + $0x130] sm:$0xff]
    %v1231 = vld [vmem:[#allocation2 + $0x138] sm:$0xff]
    %v1232 = vld [vmem:[#allocation2 + $0x140] sm:$0x1]
    %v1233 = vld [vmem:[#allocation2 + $0x148] sm:$0xff]
    %v1234 = vld [vmem:[#allocation2 + $0x150] sm:$0xff]
    %v1235 = vld [vmem:[#allocation2 + $0x158] sm:$0x1]
    %v1236 = vld [vmem:[#allocation2 + $0x160] sm:$0xff]
    %v1237 = vld [vmem:[#allocation2 + $0x168] sm:$0xff]
    %v1238 = vld [vmem:[#allocation2 + $0x170] sm:$0x1]
    %v1239 = vrot.slane %v1220, 7
    %v1240 = vrot.slane %v1221, 7
    %v1241 = vrot.slane %v1222, 7
    %v1242 = vrot.slane %v1223, 7
    %v1243 = vrot.slane %v1224, 7
    %v1244 = vrot.slane %v1225, 7
    %v1245 = vrot.slane %v1226, 7
    %v1246 = vrot.slane %v1227, 7
    %v1247 = vsel %vm135, %v1245, %v1246
    %v1248 = vsel %vm135, %v1244, %v1245
    %v1249 = vsel %vm135, %v1243, %v1244
    %v1250 = vsel %vm135, %v1242, %v1243
    %v1251 = vsel %vm135, %v1241, %v1242
    %v1252 = vsel %vm135, %v1240, %v1241
    %v1253 = vsel %vm135, %v1239, %v1240
    %v1254 = vsel %vm135, %v1246, %v1239
    %v1255 = vmul.f32 %v1254, %v60
    %v1256 = vmul.f32 %v1253, %v61
    %v1257 = vmul.f32 %v1252, %v62
    %v1258 = vmul.f32 %v1251, %v63
    %v1259 = vmul.f32 %v1250, %v64
    %v1260 = vmul.f32 %v1249, %v65
    %v1261 = vmul.f32 %v1248, %v66
    %v1262 = vmul.f32 %v1247, %v67
    %v1264 = vsel %vm334, %v1220, 0
    %v1267 = vsel %vm334, %v1221, 0
    %v1270 = vsel %vm334, %v1222, 0
    %v1273 = vsel %vm334, %v1223, 0
    %v1276 = vsel %vm334, %v1224, 0
    %v1279 = vsel %vm334, %v1225, 0
    %v1282 = vsel %vm334, %v1226, 0
    %v1285 = vsel %vm334, %v1227, 0
    %1287 = vmatpush.msra.mxu0 0.0
    %1288 = vmatpush.msra.mxu0 0.0
    %1289 = vmatpush.msra.mxu0 0.0
    %1290 = vmatpush.msra.mxu0 0.0
    %1291 = vmatpush.msra.mxu0 0.0
    %1292 = vmatpush.msra.mxu0 0.0
    %1293 = vmatpush.msra.mxu0 0.0
    %1294 = vmatpush.msra.mxu0 0.0
    %1295 = vmatpush.msra.mxu0 0.0
    %1296 = vmatpush.msra.mxu0 0.0
    %1297 = vmatpush.msra.mxu0 0.0
    %1298 = vmatpush.msra.mxu0 0.0
    %1299 = vmatpush.msra.mxu0 0.0
    %1300 = vmatpush.msra.mxu0 0.0
    %1301 = vmatpush.msra.mxu0 %v1231
    %1302 = vmatpush.msra.mxu0 %v1230
    %1303 = vmatmul.f32.gmra.mxu0 %v1264
    %v1304 = vpop.f32.mrf.mxu0
    %v1305 = vadd.f32 0.0, %v1304
    %1306 = vmatmul.f32.gmra.mxu0 %v1267
    %v1307 = vpop.f32.mrf.mxu0
    %v1308 = vadd.f32 0.0, %v1307
    %1309 = vmatmul.f32.gmra.mxu0 %v1270
    %v1310 = vpop.f32.mrf.mxu0
    %v1311 = vadd.f32 0.0, %v1310
    %1312 = vmatmul.f32.gmra.mxu0 %v1273
    %v1313 = vpop.f32.mrf.mxu0
    %v1314 = vadd.f32 0.0, %v1313
    %1315 = vmatmul.f32.gmra.mxu0 %v1276
    %v1316 = vpop.f32.mrf.mxu0
    %v1317 = vadd.f32 0.0, %v1316
    %1318 = vmatmul.f32.gmra.mxu0 %v1279
    %v1319 = vpop.f32.mrf.mxu0
    %v1320 = vadd.f32 0.0, %v1319
    %1321 = vmatmul.f32.gmra.mxu0 %v1282
    %v1322 = vpop.f32.mrf.mxu0
    %v1323 = vadd.f32 0.0, %v1322
    %1324 = vmatmul.f32.gmra.mxu0 %v1285
    %v1325 = vpop.f32.mrf.mxu0
    %v1326 = vadd.f32 0.0, %v1325
    %1327 = vdwg.mxu0
    %v1329 = vsel %vm334, %v1255, 0
    %v1332 = vsel %vm334, %v1256, 0
    %v1335 = vsel %vm334, %v1257, 0
    %v1338 = vsel %vm334, %v1258, 0
    %v1341 = vsel %vm334, %v1259, 0
    %v1344 = vsel %vm334, %v1260, 0
    %v1347 = vsel %vm334, %v1261, 0
    %v1350 = vsel %vm334, %v1262, 0
    %1352 = vmatpush.msra.mxu0 0.0
    %1353 = vmatpush.msra.mxu0 0.0
    %1354 = vmatpush.msra.mxu0 0.0
    %1355 = vmatpush.msra.mxu0 0.0
    %1356 = vmatpush.msra.mxu0 0.0
    %1357 = vmatpush.msra.mxu0 0.0
    %1358 = vmatpush.msra.mxu0 0.0
    %1359 = vmatpush.msra.mxu0 0.0
    %1360 = vmatpush.msra.mxu0 0.0
    %1361 = vmatpush.msra.mxu0 0.0
    %1362 = vmatpush.msra.mxu0 0.0
    %1363 = vmatpush.msra.mxu0 0.0
    %1364 = vmatpush.msra.mxu0 0.0
    %1365 = vmatpush.msra.mxu0 0.0
    %1366 = vmatpush.msra.mxu0 %v1229
    %1367 = vmatpush.msra.mxu0 %v1228
    %1368 = vmatmul.f32.gmra.mxu0 %v1329
    %v1369 = vpop.f32.mrf.mxu0
    %v1370 = vadd.f32 %v1305, %v1369
    %1371 = vmatmul.f32.gmra.mxu0 %v1332
    %v1372 = vpop.f32.mrf.mxu0
    %v1373 = vadd.f32 %v1308, %v1372
    %1374 = vmatmul.f32.gmra.mxu0 %v1335
    %v1375 = vpop.f32.mrf.mxu0
    %v1376 = vadd.f32 %v1311, %v1375
    %1377 = vmatmul.f32.gmra.mxu0 %v1338
    %v1378 = vpop.f32.mrf.mxu0
    %v1379 = vadd.f32 %v1314, %v1378
    %1380 = vmatmul.f32.gmra.mxu0 %v1341
    %v1381 = vpop.f32.mrf.mxu0
    %v1382 = vadd.f32 %v1317, %v1381
    %1383 = vmatmul.f32.gmra.mxu0 %v1344
    %v1384 = vpop.f32.mrf.mxu0
    %v1385 = vadd.f32 %v1320, %v1384
    %1386 = vmatmul.f32.gmra.mxu0 %v1347
    %v1387 = vpop.f32.mrf.mxu0
    %v1388 = vadd.f32 %v1323, %v1387
    %1389 = vmatmul.f32.gmra.mxu0 %v1350
    %v1390 = vpop.f32.mrf.mxu0
    %v1391 = vadd.f32 %v1326, %v1390
    %1392 = vdwg.mxu0
    %v1393 = vperm.slane %v1232, 0
    %v1394 = vadd.f32 %v1370, %v1393
    %v1395 = vadd.f32 %v1373, %v1393
    %v1396 = vadd.f32 %v1376, %v1393
    %v1397 = vadd.f32 %v1379, %v1393
    %v1398 = vadd.f32 %v1382, %v1393
    %v1399 = vadd.f32 %v1385, %v1393
    %v1400 = vadd.f32 %v1388, %v1393
    %v1401 = vadd.f32 %v1391, %v1393
    %v1402 = vmax.f32 %v1394, 0.0
    %v1403 = vmax.f32 %v1395, 0.0
    %v1404 = vmax.f32 %v1396, 0.0
    %v1405 = vmax.f32 %v1397, 0.0
    %v1406 = vmax.f32 %v1398, 0.0
    %v1407 = vmax.f32 %v1399, 0.0
    %v1408 = vmax.f32 %v1400, 0.0
    %v1409 = vmax.f32 %v1401, 0.0
    %v1411 = vsel %vm334, %v1402, 0
    %v1414 = vsel %vm334, %v1403, 0
    %v1417 = vsel %vm334, %v1404, 0
    %v1420 = vsel %vm334, %v1405, 0
    %v1423 = vsel %vm334, %v1406, 0
    %v1426 = vsel %vm334, %v1407, 0
    %v1429 = vsel %vm334, %v1408, 0
    %v1432 = vsel %vm334, %v1409, 0
    %1434 = vmatpush.msra.mxu0 0.0
    %1435 = vmatpush.msra.mxu0 0.0
    %1436 = vmatpush.msra.mxu0 0.0
    %1437 = vmatpush.msra.mxu0 0.0
    %1438 = vmatpush.msra.mxu0 0.0
    %1439 = vmatpush.msra.mxu0 0.0
    %1440 = vmatpush.msra.mxu0 0.0
    %1441 = vmatpush.msra.mxu0 0.0
    %1442 = vmatpush.msra.mxu0 0.0
    %1443 = vmatpush.msra.mxu0 0.0
    %1444 = vmatpush.msra.mxu0 0.0
    %1445 = vmatpush.msra.mxu0 0.0
    %1446 = vmatpush.msra.mxu0 0.0
    %1447 = vmatpush.msra.mxu0 0.0
    %1448 = vmatpush.msra.mxu0 %v1234
    %1449 = vmatpush.msra.mxu0 %v1233
    %1450 = vmatmul.f32.gmra.mxu0 %v1411
    %v1451 = vpop.f32.mrf.mxu0
    %v1452 = vadd.f32 0.0, %v1451
    %1453 = vmatmul.f32.gmra.mxu0 %v1414
    %v1454 = vpop.f32.mrf.mxu0
    %v1455 = vadd.f32 0.0, %v1454
    %1456 = vmatmul.f32.gmra.mxu0 %v1417
    %v1457 = vpop.f32.mrf.mxu0
    %v1458 = vadd.f32 0.0, %v1457
    %1459 = vmatmul.f32.gmra.mxu0 %v1420
    %v1460 = vpop.f32.mrf.mxu0
    %v1461 = vadd.f32 0.0, %v1460
    %1462 = vmatmul.f32.gmra.mxu0 %v1423
    %v1463 = vpop.f32.mrf.mxu0
    %v1464 = vadd.f32 0.0, %v1463
    %1465 = vmatmul.f32.gmra.mxu0 %v1426
    %v1466 = vpop.f32.mrf.mxu0
    %v1467 = vadd.f32 0.0, %v1466
    %1468 = vmatmul.f32.gmra.mxu0 %v1429
    %v1469 = vpop.f32.mrf.mxu0
    %v1470 = vadd.f32 0.0, %v1469
    %1471 = vmatmul.f32.gmra.mxu0 %v1432
    %v1472 = vpop.f32.mrf.mxu0
    %v1473 = vadd.f32 0.0, %v1472
    %1474 = vdwg.mxu0
    %v1475 = vadd.f32 %v1170, %v1452
    %v1476 = vadd.f32 %v1171, %v1455
    %v1477 = vadd.f32 %v1172, %v1458
    %v1478 = vadd.f32 %v1173, %v1461
    %v1479 = vadd.f32 %v1174, %v1464
    %v1480 = vadd.f32 %v1175, %v1467
    %v1481 = vadd.f32 %v1176, %v1470
    %v1482 = vadd.f32 %v1177, %v1473
    %v1483 = vperm.slane %v1235, 0
    %v1484 = vadd.f32 %v1475, %v1483
    %v1485 = vadd.f32 %v1476, %v1483
    %v1486 = vadd.f32 %v1477, %v1483
    %v1487 = vadd.f32 %v1478, %v1483
    %v1488 = vadd.f32 %v1479, %v1483
    %v1489 = vadd.f32 %v1480, %v1483
    %v1490 = vadd.f32 %v1481, %v1483
    %v1491 = vadd.f32 %v1482, %v1483
    %v1492 = vperm.slane %v1238, 0
    %1493 = vmatpush.msra.mxu0 0.0
    %1494 = vmatpush.msra.mxu0 0.0
    %1495 = vmatpush.msra.mxu0 0.0
    %1496 = vmatpush.msra.mxu0 0.0
    %1497 = vmatpush.msra.mxu0 0.0
    %1498 = vmatpush.msra.mxu0 0.0
    %1499 = vmatpush.msra.mxu0 0.0
    %1500 = vmatpush.msra.mxu0 0.0
    %1501 = vmatpush.msra.mxu0 0.0
    %1502 = vmatpush.msra.mxu0 0.0
    %1503 = vmatpush.msra.mxu0 0.0
    %1504 = vmatpush.msra.mxu0 0.0
    %1505 = vmatpush.msra.mxu0 0.0
    %1506 = vmatpush.msra.mxu0 0.0
    %1507 = vmatpush.msra.mxu0 %v1237
    %1508 = vmatpush.msra.mxu0 %v1236
    %1509 = vmatmul.f32.gmra.mxu0 %v1411
    %v1510 = vpop.f32.mrf.mxu0
    %v1511 = vadd.f32 %v1492, %v1510
    %1512 = vmatmul.f32.gmra.mxu0 %v1414
    %v1513 = vpop.f32.mrf.mxu0
    %v1514 = vadd.f32 %v1492, %v1513
    %1515 = vmatmul.f32.gmra.mxu0 %v1417
    %v1516 = vpop.f32.mrf.mxu0
    %v1517 = vadd.f32 %v1492, %v1516
    %1518 = vmatmul.f32.gmra.mxu0 %v1420
    %v1519 = vpop.f32.mrf.mxu0
    %v1520 = vadd.f32 %v1492, %v1519
    %1521 = vmatmul.f32.gmra.mxu0 %v1423
    %v1522 = vpop.f32.mrf.mxu0
    %v1523 = vadd.f32 %v1492, %v1522
    %1524 = vmatmul.f32.gmra.mxu0 %v1426
    %v1525 = vpop.f32.mrf.mxu0
    %v1526 = vadd.f32 %v1492, %v1525
    %1527 = vmatmul.f32.gmra.mxu0 %v1429
    %v1528 = vpop.f32.mrf.mxu0
    %v1529 = vadd.f32 %v1492, %v1528
    %1530 = vmatmul.f32.gmra.mxu0 %v1432
    %v1531 = vpop.f32.mrf.mxu0
    %v1532 = vadd.f32 %v1492, %v1531
    %1533 = vdwg.mxu0
    %v1534 = vadd.f32 %v1511, %v1220
    %v1535 = vadd.f32 %v1514, %v1221
    %v1536 = vadd.f32 %v1517, %v1222
    %v1537 = vadd.f32 %v1520, %v1223
    %v1538 = vadd.f32 %v1523, %v1224
    %v1539 = vadd.f32 %v1526, %v1225
    %v1540 = vadd.f32 %v1529, %v1226
    %v1541 = vadd.f32 %v1532, %v1227
    %v1542 = vld [vmem:[#allocation2 + $0x178] sm:$0xff]
    %v1543 = vld [vmem:[#allocation2 + $0x180] sm:$0xff]
    %v1544 = vld [vmem:[#allocation2 + $0x188] sm:$0xff]
    %v1545 = vld [vmem:[#allocation2 + $0x190] sm:$0xff]
    %v1546 = vld [vmem:[#allocation2 + $0x198] sm:$0x1]
    %v1547 = vld [vmem:[#allocation2 + $0x1a0] sm:$0xff]
    %v1548 = vld [vmem:[#allocation2 + $0x1a8] sm:$0xff]
    %v1549 = vld [vmem:[#allocation2 + $0x1b0] sm:$0x1]
    %v1550 = vld [vmem:[#allocation2 + $0x1b8] sm:$0xff]
    %v1551 = vld [vmem:[#allocation2 + $0x1c0] sm:$0xff]
    %v1552 = vld [vmem:[#allocation2 + $0x1c8] sm:$0x1]
    %v1553 = vrot.slane %v1534, 6
    %v1554 = vrot.slane %v1535, 6
    %v1555 = vrot.slane %v1536, 6
    %v1556 = vrot.slane %v1537, 6
    %v1557 = vrot.slane %v1538, 6
    %v1558 = vrot.slane %v1539, 6
    %v1559 = vrot.slane %v1540, 6
    %v1560 = vrot.slane %v1541, 6
    %v1561 = vsel %vm617, %v1559, %v1560
    %v1562 = vsel %vm617, %v1558, %v1559
    %v1563 = vsel %vm617, %v1557, %v1558
    %v1564 = vsel %vm617, %v1556, %v1557
    %v1565 = vsel %vm617, %v1555, %v1556
    %v1566 = vsel %vm617, %v1554, %v1555
    %v1567 = vsel %vm617, %v1553, %v1554
    %v1568 = vsel %vm617, %v1560, %v1553
    %v1569 = vmul.f32 %v1568, %v84
    %v1570 = vmul.f32 %v1567, %v85
    %v1571 = vmul.f32 %v1566, %v86
    %v1572 = vmul.f32 %v1565, %v87
    %v1573 = vmul.f32 %v1564, %v88
    %v1574 = vmul.f32 %v1563, %v89
    %v1575 = vmul.f32 %v1562, %v90
    %v1576 = vmul.f32 %v1561, %v91
    %v1578 = vsel %vm334, %v1534, 0
    %v1581 = vsel %vm334, %v1535, 0
    %v1584 = vsel %vm334, %v1536, 0
    %v1587 = vsel %vm334, %v1537, 0
    %v1590 = vsel %vm334, %v1538, 0
    %v1593 = vsel %vm334, %v1539, 0
    %v1596 = vsel %vm334, %v1540, 0
    %v1599 = vsel %vm334, %v1541, 0
    %1601 = vmatpush.msra.mxu0 0.0
    %1602 = vmatpush.msra.mxu0 0.0
    %1603 = vmatpush.msra.mxu0 0.0
    %1604 = vmatpush.msra.mxu0 0.0
    %1605 = vmatpush.msra.mxu0 0.0
    %1606 = vmatpush.msra.mxu0 0.0
    %1607 = vmatpush.msra.mxu0 0.0
    %1608 = vmatpush.msra.mxu0 0.0
    %1609 = vmatpush.msra.mxu0 0.0
    %1610 = vmatpush.msra.mxu0 0.0
    %1611 = vmatpush.msra.mxu0 0.0
    %1612 = vmatpush.msra.mxu0 0.0
    %1613 = vmatpush.msra.mxu0 0.0
    %1614 = vmatpush.msra.mxu0 0.0
    %1615 = vmatpush.msra.mxu0 %v1545
    %1616 = vmatpush.msra.mxu0 %v1544
    %1617 = vmatmul.f32.gmra.mxu0 %v1578
    %v1618 = vpop.f32.mrf.mxu0
    %v1619 = vadd.f32 0.0, %v1618
    %1620 = vmatmul.f32.gmra.mxu0 %v1581
    %v1621 = vpop.f32.mrf.mxu0
    %v1622 = vadd.f32 0.0, %v1621
    %1623 = vmatmul.f32.gmra.mxu0 %v1584
    %v1624 = vpop.f32.mrf.mxu0
    %v1625 = vadd.f32 0.0, %v1624
    %1626 = vmatmul.f32.gmra.mxu0 %v1587
    %v1627 = vpop.f32.mrf.mxu0
    %v1628 = vadd.f32 0.0, %v1627
    %1629 = vmatmul.f32.gmra.mxu0 %v1590
    %v1630 = vpop.f32.mrf.mxu0
    %v1631 = vadd.f32 0.0, %v1630
    %1632 = vmatmul.f32.gmra.mxu0 %v1593
    %v1633 = vpop.f32.mrf.mxu0
    %v1634 = vadd.f32 0.0, %v1633
    %1635 = vmatmul.f32.gmra.mxu0 %v1596
    %v1636 = vpop.f32.mrf.mxu0
    %v1637 = vadd.f32 0.0, %v1636
    %1638 = vmatmul.f32.gmra.mxu0 %v1599
    %v1639 = vpop.f32.mrf.mxu0
    %v1640 = vadd.f32 0.0, %v1639
    %1641 = vdwg.mxu0
    %v1643 = vsel %vm334, %v1569, 0
    %v1646 = vsel %vm334, %v1570, 0
    %v1649 = vsel %vm334, %v1571, 0
    %v1652 = vsel %vm334, %v1572, 0
    %v1655 = vsel %vm334, %v1573, 0
    %v1658 = vsel %vm334, %v1574, 0
    %v1661 = vsel %vm334, %v1575, 0
    %v1664 = vsel %vm334, %v1576, 0
    %1666 = vmatpush.msra.mxu0 0.0
    %1667 = vmatpush.msra.mxu0 0.0
    %1668 = vmatpush.msra.mxu0 0.0
    %1669 = vmatpush.msra.mxu0 0.0
    %1670 = vmatpush.msra.mxu0 0.0
    %1671 = vmatpush.msra.mxu0 0.0
    %1672 = vmatpush.msra.mxu0 0.0
    %1673 = vmatpush.msra.mxu0 0.0
    %1674 = vmatpush.msra.mxu0 0.0
    %1675 = vmatpush.msra.mxu0 0.0
    %1676 = vmatpush.msra.mxu0 0.0
    %1677 = vmatpush.msra.mxu0 0.0
    %1678 = vmatpush.msra.mxu0 0.0
    %1679 = vmatpush.msra.mxu0 0.0
    %1680 = vmatpush.msra.mxu0 %v1543
    %1681 = vmatpush.msra.mxu0 %v1542
    %1682 = vmatmul.f32.gmra.mxu0 %v1643
    %v1683 = vpop.f32.mrf.mxu0
    %v1684 = vadd.f32 %v1619, %v1683
    %1685 = vmatmul.f32.gmra.mxu0 %v1646
    %v1686 = vpop.f32.mrf.mxu0
    %v1687 = vadd.f32 %v1622, %v1686
    %1688 = vmatmul.f32.gmra.mxu0 %v1649
    %v1689 = vpop.f32.mrf.mxu0
    %v1690 = vadd.f32 %v1625, %v1689
    %1691 = vmatmul.f32.gmra.mxu0 %v1652
    %v1692 = vpop.f32.mrf.mxu0
    %v1693 = vadd.f32 %v1628, %v1692
    %1694 = vmatmul.f32.gmra.mxu0 %v1655
    %v1695 = vpop.f32.mrf.mxu0
    %v1696 = vadd.f32 %v1631, %v1695
    %1697 = vmatmul.f32.gmra.mxu0 %v1658
    %v1698 = vpop.f32.mrf.mxu0
    %v1699 = vadd.f32 %v1634, %v1698
    %1700 = vmatmul.f32.gmra.mxu0 %v1661
    %v1701 = vpop.f32.mrf.mxu0
    %v1702 = vadd.f32 %v1637, %v1701
    %1703 = vmatmul.f32.gmra.mxu0 %v1664
    %v1704 = vpop.f32.mrf.mxu0
    %v1705 = vadd.f32 %v1640, %v1704
    %1706 = vdwg.mxu0
    %v1707 = vperm.slane %v1546, 0
    %v1708 = vadd.f32 %v1684, %v1707
    %v1709 = vadd.f32 %v1687, %v1707
    %v1710 = vadd.f32 %v1690, %v1707
    %v1711 = vadd.f32 %v1693, %v1707
    %v1712 = vadd.f32 %v1696, %v1707
    %v1713 = vadd.f32 %v1699, %v1707
    %v1714 = vadd.f32 %v1702, %v1707
    %v1715 = vadd.f32 %v1705, %v1707
    %v1716 = vmax.f32 %v1708, 0.0
    %v1717 = vmax.f32 %v1709, 0.0
    %v1718 = vmax.f32 %v1710, 0.0
    %v1719 = vmax.f32 %v1711, 0.0
    %v1720 = vmax.f32 %v1712, 0.0
    %v1721 = vmax.f32 %v1713, 0.0
    %v1722 = vmax.f32 %v1714, 0.0
    %v1723 = vmax.f32 %v1715, 0.0
    %v1725 = vsel %vm334, %v1716, 0
    %v1728 = vsel %vm334, %v1717, 0
    %v1731 = vsel %vm334, %v1718, 0
    %v1734 = vsel %vm334, %v1719, 0
    %v1737 = vsel %vm334, %v1720, 0
    %v1740 = vsel %vm334, %v1721, 0
    %v1743 = vsel %vm334, %v1722, 0
    %v1746 = vsel %vm334, %v1723, 0
    %1748 = vmatpush.msra.mxu0 0.0
    %1749 = vmatpush.msra.mxu0 0.0
    %1750 = vmatpush.msra.mxu0 0.0
    %1751 = vmatpush.msra.mxu0 0.0
    %1752 = vmatpush.msra.mxu0 0.0
    %1753 = vmatpush.msra.mxu0 0.0
    %1754 = vmatpush.msra.mxu0 0.0
    %1755 = vmatpush.msra.mxu0 0.0
    %1756 = vmatpush.msra.mxu0 0.0
    %1757 = vmatpush.msra.mxu0 0.0
    %1758 = vmatpush.msra.mxu0 0.0
    %1759 = vmatpush.msra.mxu0 0.0
    %1760 = vmatpush.msra.mxu0 0.0
    %1761 = vmatpush.msra.mxu0 0.0
    %1762 = vmatpush.msra.mxu0 %v1548
    %1763 = vmatpush.msra.mxu0 %v1547
    %1764 = vmatmul.f32.gmra.mxu0 %v1725
    %v1765 = vpop.f32.mrf.mxu0
    %v1766 = vadd.f32 0.0, %v1765
    %1767 = vmatmul.f32.gmra.mxu0 %v1728
    %v1768 = vpop.f32.mrf.mxu0
    %v1769 = vadd.f32 0.0, %v1768
    %1770 = vmatmul.f32.gmra.mxu0 %v1731
    %v1771 = vpop.f32.mrf.mxu0
    %v1772 = vadd.f32 0.0, %v1771
    %1773 = vmatmul.f32.gmra.mxu0 %v1734
    %v1774 = vpop.f32.mrf.mxu0
    %v1775 = vadd.f32 0.0, %v1774
    %1776 = vmatmul.f32.gmra.mxu0 %v1737
    %v1777 = vpop.f32.mrf.mxu0
    %v1778 = vadd.f32 0.0, %v1777
    %1779 = vmatmul.f32.gmra.mxu0 %v1740
    %v1780 = vpop.f32.mrf.mxu0
    %v1781 = vadd.f32 0.0, %v1780
    %1782 = vmatmul.f32.gmra.mxu0 %v1743
    %v1783 = vpop.f32.mrf.mxu0
    %v1784 = vadd.f32 0.0, %v1783
    %1785 = vmatmul.f32.gmra.mxu0 %v1746
    %v1786 = vpop.f32.mrf.mxu0
    %v1787 = vadd.f32 0.0, %v1786
    %1788 = vdwg.mxu0
    %v1789 = vadd.f32 %v1484, %v1766
    %v1790 = vadd.f32 %v1485, %v1769
    %v1791 = vadd.f32 %v1486, %v1772
    %v1792 = vadd.f32 %v1487, %v1775
    %v1793 = vadd.f32 %v1488, %v1778
    %v1794 = vadd.f32 %v1489, %v1781
    %v1795 = vadd.f32 %v1490, %v1784
    %v1796 = vadd.f32 %v1491, %v1787
    %v1797 = vperm.slane %v1549, 0
    %v1798 = vadd.f32 %v1789, %v1797
    %v1799 = vadd.f32 %v1790, %v1797
    %v1800 = vadd.f32 %v1791, %v1797
    %v1801 = vadd.f32 %v1792, %v1797
    %v1802 = vadd.f32 %v1793, %v1797
    %v1803 = vadd.f32 %v1794, %v1797
    %v1804 = vadd.f32 %v1795, %v1797
    %v1805 = vadd.f32 %v1796, %v1797
    %v1806 = vperm.slane %v1552, 0
    %1807 = vmatpush.msra.mxu0 0.0
    %1808 = vmatpush.msra.mxu0 0.0
    %1809 = vmatpush.msra.mxu0 0.0
    %1810 = vmatpush.msra.mxu0 0.0
    %1811 = vmatpush.msra.mxu0 0.0
    %1812 = vmatpush.msra.mxu0 0.0
    %1813 = vmatpush.msra.mxu0 0.0
    %1814 = vmatpush.msra.mxu0 0.0
    %1815 = vmatpush.msra.mxu0 0.0
    %1816 = vmatpush.msra.mxu0 0.0
    %1817 = vmatpush.msra.mxu0 0.0
    %1818 = vmatpush.msra.mxu0 0.0
    %1819 = vmatpush.msra.mxu0 0.0
    %1820 = vmatpush.msra.mxu0 0.0
    %1821 = vmatpush.msra.mxu0 %v1551
    %1822 = vmatpush.msra.mxu0 %v1550
    %1823 = vmatmul.f32.gmra.mxu0 %v1725
    %v1824 = vpop.f32.mrf.mxu0
    %v1825 = vadd.f32 %v1806, %v1824
    %1826 = vmatmul.f32.gmra.mxu0 %v1728
    %v1827 = vpop.f32.mrf.mxu0
    %v1828 = vadd.f32 %v1806, %v1827
    %1829 = vmatmul.f32.gmra.mxu0 %v1731
    %v1830 = vpop.f32.mrf.mxu0
    %v1831 = vadd.f32 %v1806, %v1830
    %1832 = vmatmul.f32.gmra.mxu0 %v1734
    %v1833 = vpop.f32.mrf.mxu0
    %v1834 = vadd.f32 %v1806, %v1833
    %1835 = vmatmul.f32.gmra.mxu0 %v1737
    %v1836 = vpop.f32.mrf.mxu0
    %v1837 = vadd.f32 %v1806, %v1836
    %1838 = vmatmul.f32.gmra.mxu0 %v1740
    %v1839 = vpop.f32.mrf.mxu0
    %v1840 = vadd.f32 %v1806, %v1839
    %1841 = vmatmul.f32.gmra.mxu0 %v1743
    %v1842 = vpop.f32.mrf.mxu0
    %v1843 = vadd.f32 %v1806, %v1842
    %1844 = vmatmul.f32.gmra.mxu0 %v1746
    %v1845 = vpop.f32.mrf.mxu0
    %v1846 = vadd.f32 %v1806, %v1845
    %1847 = vdwg.mxu0
    %v1848 = vadd.f32 %v1825, %v1534
    %v1849 = vadd.f32 %v1828, %v1535
    %v1850 = vadd.f32 %v1831, %v1536
    %v1851 = vadd.f32 %v1834, %v1537
    %v1852 = vadd.f32 %v1837, %v1538
    %v1853 = vadd.f32 %v1840, %v1539
    %v1854 = vadd.f32 %v1843, %v1540
    %v1855 = vadd.f32 %v1846, %v1541
    %v1856 = vld [vmem:[#allocation2 + $0x1d0] sm:$0xff]
    %v1857 = vld [vmem:[#allocation2 + $0x1d8] sm:$0xff]
    %v1858 = vld [vmem:[#allocation2 + $0x1e0] sm:$0xff]
    %v1859 = vld [vmem:[#allocation2 + $0x1e8] sm:$0xff]
    %v1860 = vld [vmem:[#allocation2 + $0x1f0] sm:$0x1]
    %v1861 = vld [vmem:[#allocation2 + $0x1f8] sm:$0xff]
    %v1862 = vld [vmem:[#allocation2 + $0x200] sm:$0xff]
    %v1863 = vld [vmem:[#allocation2 + $0x208] sm:$0x1]
    %v1864 = vrot.slane %v1848, 4
    %v1865 = vrot.slane %v1849, 4
    %v1866 = vrot.slane %v1850, 4
    %v1867 = vrot.slane %v1851, 4
    %v1868 = vrot.slane %v1852, 4
    %v1869 = vrot.slane %v1853, 4
    %v1870 = vrot.slane %v1854, 4
    %v1871 = vrot.slane %v1855, 4
    %v1872 = vsel %vm932, %v1870, %v1871
    %v1873 = vsel %vm932, %v1869, %v1870
    %v1874 = vsel %vm932, %v1868, %v1869
    %v1875 = vsel %vm932, %v1867, %v1868
    %v1876 = vsel %vm932, %v1866, %v1867
    %v1877 = vsel %vm932, %v1865, %v1866
    %v1878 = vsel %vm932, %v1864, %v1865
    %v1879 = vsel %vm932, %v1871, %v1864
    %v1880 = vmul.f32 %v1879, %v108
    %v1881 = vmul.f32 %v1878, %v109
    %v1882 = vmul.f32 %v1877, %v110
    %v1883 = vmul.f32 %v1876, %v111
    %v1884 = vmul.f32 %v1875, %v112
    %v1885 = vmul.f32 %v1874, %v113
    %v1886 = vmul.f32 %v1873, %v114
    %v1887 = vmul.f32 %v1872, %v115
    %v1889 = vsel %vm334, %v1848, 0
    %v1892 = vsel %vm334, %v1849, 0
    %v1895 = vsel %vm334, %v1850, 0
    %v1898 = vsel %vm334, %v1851, 0
    %v1901 = vsel %vm334, %v1852, 0
    %v1904 = vsel %vm334, %v1853, 0
    %v1907 = vsel %vm334, %v1854, 0
    %v1910 = vsel %vm334, %v1855, 0
    %1912 = vmatpush.msra.mxu0 0.0
    %1913 = vmatpush.msra.mxu0 0.0
    %1914 = vmatpush.msra.mxu0 0.0
    %1915 = vmatpush.msra.mxu0 0.0
    %1916 = vmatpush.msra.mxu0 0.0
    %1917 = vmatpush.msra.mxu0 0.0
    %1918 = vmatpush.msra.mxu0 0.0
    %1919 = vmatpush.msra.mxu0 0.0
    %1920 = vmatpush.msra.mxu0 0.0
    %1921 = vmatpush.msra.mxu0 0.0
    %1922 = vmatpush.msra.mxu0 0.0
    %1923 = vmatpush.msra.mxu0 0.0
    %1924 = vmatpush.msra.mxu0 0.0
    %1925 = vmatpush.msra.mxu0 0.0
    %1926 = vmatpush.msra.mxu0 %v1859
    %1927 = vmatpush.msra.mxu0 %v1858
    %1928 = vmatmul.f32.gmra.mxu0 %v1889
    %v1929 = vpop.f32.mrf.mxu0
    %v1930 = vadd.f32 0.0, %v1929
    %1931 = vmatmul.f32.gmra.mxu0 %v1892
    %v1932 = vpop.f32.mrf.mxu0
    %v1933 = vadd.f32 0.0, %v1932
    %1934 = vmatmul.f32.gmra.mxu0 %v1895
    %v1935 = vpop.f32.mrf.mxu0
    %v1936 = vadd.f32 0.0, %v1935
    %1937 = vmatmul.f32.gmra.mxu0 %v1898
    %v1938 = vpop.f32.mrf.mxu0
    %v1939 = vadd.f32 0.0, %v1938
    %1940 = vmatmul.f32.gmra.mxu0 %v1901
    %v1941 = vpop.f32.mrf.mxu0
    %v1942 = vadd.f32 0.0, %v1941
    %1943 = vmatmul.f32.gmra.mxu0 %v1904
    %v1944 = vpop.f32.mrf.mxu0
    %v1945 = vadd.f32 0.0, %v1944
    %1946 = vmatmul.f32.gmra.mxu0 %v1907
    %v1947 = vpop.f32.mrf.mxu0
    %v1948 = vadd.f32 0.0, %v1947
    %1949 = vmatmul.f32.gmra.mxu0 %v1910
    %v1950 = vpop.f32.mrf.mxu0
    %v1951 = vadd.f32 0.0, %v1950
    %1952 = vdwg.mxu0
    %v1954 = vsel %vm334, %v1880, 0
    %v1957 = vsel %vm334, %v1881, 0
    %v1960 = vsel %vm334, %v1882, 0
    %v1963 = vsel %vm334, %v1883, 0
    %v1966 = vsel %vm334, %v1884, 0
    %v1969 = vsel %vm334, %v1885, 0
    %v1972 = vsel %vm334, %v1886, 0
    %v1975 = vsel %vm334, %v1887, 0
    %1977 = vmatpush.msra.mxu0 0.0
    %1978 = vmatpush.msra.mxu0 0.0
    %1979 = vmatpush.msra.mxu0 0.0
    %1980 = vmatpush.msra.mxu0 0.0
    %1981 = vmatpush.msra.mxu0 0.0
    %1982 = vmatpush.msra.mxu0 0.0
    %1983 = vmatpush.msra.mxu0 0.0
    %1984 = vmatpush.msra.mxu0 0.0
    %1985 = vmatpush.msra.mxu0 0.0
    %1986 = vmatpush.msra.mxu0 0.0
    %1987 = vmatpush.msra.mxu0 0.0
    %1988 = vmatpush.msra.mxu0 0.0
    %1989 = vmatpush.msra.mxu0 0.0
    %1990 = vmatpush.msra.mxu0 0.0
    %1991 = vmatpush.msra.mxu0 %v1857
    %1992 = vmatpush.msra.mxu0 %v1856
    %1993 = vmatmul.f32.gmra.mxu0 %v1954
    %v1994 = vpop.f32.mrf.mxu0
    %v1995 = vadd.f32 %v1930, %v1994
    %1996 = vmatmul.f32.gmra.mxu0 %v1957
    %v1997 = vpop.f32.mrf.mxu0
    %v1998 = vadd.f32 %v1933, %v1997
    %1999 = vmatmul.f32.gmra.mxu0 %v1960
    %v2000 = vpop.f32.mrf.mxu0
    %v2001 = vadd.f32 %v1936, %v2000
    %2002 = vmatmul.f32.gmra.mxu0 %v1963
    %v2003 = vpop.f32.mrf.mxu0
    %v2004 = vadd.f32 %v1939, %v2003
    %2005 = vmatmul.f32.gmra.mxu0 %v1966
    %v2006 = vpop.f32.mrf.mxu0
    %v2007 = vadd.f32 %v1942, %v2006
    %2008 = vmatmul.f32.gmra.mxu0 %v1969
    %v2009 = vpop.f32.mrf.mxu0
    %v2010 = vadd.f32 %v1945, %v2009
    %2011 = vmatmul.f32.gmra.mxu0 %v1972
    %v2012 = vpop.f32.mrf.mxu0
    %v2013 = vadd.f32 %v1948, %v2012
    %2014 = vmatmul.f32.gmra.mxu0 %v1975
    %v2015 = vpop.f32.mrf.mxu0
    %v2016 = vadd.f32 %v1951, %v2015
    %2017 = vdwg.mxu0
    %v2018 = vperm.slane %v1860, 0
    %v2019 = vadd.f32 %v1995, %v2018
    %v2020 = vadd.f32 %v1998, %v2018
    %v2021 = vadd.f32 %v2001, %v2018
    %v2022 = vadd.f32 %v2004, %v2018
    %v2023 = vadd.f32 %v2007, %v2018
    %v2024 = vadd.f32 %v2010, %v2018
    %v2025 = vadd.f32 %v2013, %v2018
    %v2026 = vadd.f32 %v2016, %v2018
    %v2027 = vmax.f32 %v2019, 0.0
    %v2028 = vmax.f32 %v2020, 0.0
    %v2029 = vmax.f32 %v2021, 0.0
    %v2030 = vmax.f32 %v2022, 0.0
    %v2031 = vmax.f32 %v2023, 0.0
    %v2032 = vmax.f32 %v2024, 0.0
    %v2033 = vmax.f32 %v2025, 0.0
    %v2034 = vmax.f32 %v2026, 0.0
    %v2036 = vsel %vm334, %v2027, 0
    %v2039 = vsel %vm334, %v2028, 0
    %v2042 = vsel %vm334, %v2029, 0
    %v2045 = vsel %vm334, %v2030, 0
    %v2048 = vsel %vm334, %v2031, 0
    %v2051 = vsel %vm334, %v2032, 0
    %v2054 = vsel %vm334, %v2033, 0
    %v2057 = vsel %vm334, %v2034, 0
    %2059 = vmatpush.msra.mxu0 0.0
    %2060 = vmatpush.msra.mxu0 0.0
    %2061 = vmatpush.msra.mxu0 0.0
    %2062 = vmatpush.msra.mxu0 0.0
    %2063 = vmatpush.msra.mxu0 0.0
    %2064 = vmatpush.msra.mxu0 0.0
    %2065 = vmatpush.msra.mxu0 0.0
    %2066 = vmatpush.msra.mxu0 0.0
    %2067 = vmatpush.msra.mxu0 0.0
    %2068 = vmatpush.msra.mxu0 0.0
    %2069 = vmatpush.msra.mxu0 0.0
    %2070 = vmatpush.msra.mxu0 0.0
    %2071 = vmatpush.msra.mxu0 0.0
    %2072 = vmatpush.msra.mxu0 0.0
    %2073 = vmatpush.msra.mxu0 %v1862
    %2074 = vmatpush.msra.mxu0 %v1861
    %2075 = vmatmul.f32.gmra.mxu0 %v2036
    %v2076 = vpop.f32.mrf.mxu0
    %v2077 = vadd.f32 0.0, %v2076
    %2078 = vmatmul.f32.gmra.mxu0 %v2039
    %v2079 = vpop.f32.mrf.mxu0
    %v2080 = vadd.f32 0.0, %v2079
    %2081 = vmatmul.f32.gmra.mxu0 %v2042
    %v2082 = vpop.f32.mrf.mxu0
    %v2083 = vadd.f32 0.0, %v2082
    %2084 = vmatmul.f32.gmra.mxu0 %v2045
    %v2085 = vpop.f32.mrf.mxu0
    %v2086 = vadd.f32 0.0, %v2085
    %2087 = vmatmul.f32.gmra.mxu0 %v2048
    %v2088 = vpop.f32.mrf.mxu0
    %v2089 = vadd.f32 0.0, %v2088
    %2090 = vmatmul.f32.gmra.mxu0 %v2051
    %v2091 = vpop.f32.mrf.mxu0
    %v2092 = vadd.f32 0.0, %v2091
    %2093 = vmatmul.f32.gmra.mxu0 %v2054
    %v2094 = vpop.f32.mrf.mxu0
    %v2095 = vadd.f32 0.0, %v2094
    %2096 = vmatmul.f32.gmra.mxu0 %v2057
    %v2097 = vpop.f32.mrf.mxu0
    %v2098 = vadd.f32 0.0, %v2097
    %2099 = vdwg.mxu0
    %v2100 = vadd.f32 %v1798, %v2077
    %v2101 = vadd.f32 %v1799, %v2080
    %v2102 = vadd.f32 %v1800, %v2083
    %v2103 = vadd.f32 %v1801, %v2086
    %v2104 = vadd.f32 %v1802, %v2089
    %v2105 = vadd.f32 %v1803, %v2092
    %v2106 = vadd.f32 %v1804, %v2095
    %v2107 = vadd.f32 %v1805, %v2098
    %v2108 = vperm.slane %v1863, 0
    %v2109 = vadd.f32 %v2100, %v2108
    %v2110 = vadd.f32 %v2101, %v2108
    %v2111 = vadd.f32 %v2102, %v2108
    %v2112 = vadd.f32 %v2103, %v2108
    %v2113 = vadd.f32 %v2104, %v2108
    %v2114 = vadd.f32 %v2105, %v2108
    %v2115 = vadd.f32 %v2106, %v2108
    %v2116 = vadd.f32 %v2107, %v2108
    %v2117 = vld [vmem:[#allocation2 + $0x228] sm:$0xff]
    %v2118 = vld [vmem:[#allocation2 + $0x230] sm:$0xff]
    %v2119 = vld [vmem:[#allocation2 + $0x238] sm:$0xff]
    %v2120 = vld [vmem:[#allocation2 + $0x240] sm:$0xff]
    %v2121 = vld [vmem:[#allocation2 + $0x248] sm:$0xff]
    %v2122 = vld [vmem:[#allocation2 + $0x250] sm:$0xff]
    %v2123 = vld [vmem:[#allocation2 + $0x258] sm:$0xff]
    %v2124 = vld [vmem:[#allocation2 + $0x260] sm:$0xff]
    %v2125 = vld [vmem:[#allocation2 + $0x268] sm:$0x1]
    %v2126 = vld [vmem:[#allocation2 + $0x270] sm:$0x1]
    %v2127 = vld [vmem:[#allocation2 + $0x278] sm:$0x1]
    %v2128 = vmax.f32 %v2109, 0.0
    %v2129 = vmax.f32 %v2110, 0.0
    %v2130 = vmax.f32 %v2111, 0.0
    %v2131 = vmax.f32 %v2112, 0.0
    %v2132 = vmax.f32 %v2113, 0.0
    %v2133 = vmax.f32 %v2114, 0.0
    %v2134 = vmax.f32 %v2115, 0.0
    %v2135 = vmax.f32 %v2116, 0.0
    %v2136 = vperm.slane %v2125, 0
    %vm2137 = vcmask 523264
    %v2139 = vsel %vm2137, %v2128, 0
    %v2142 = vsel %vm2137, %v2129, 0
    %v2145 = vsel %vm2137, %v2130, 0
    %v2148 = vsel %vm2137, %v2131, 0
    %v2151 = vsel %vm2137, %v2132, 0
    %v2154 = vsel %vm2137, %v2133, 0
    %v2157 = vsel %vm2137, %v2134, 0
    %v2160 = vsel %vm2137, %v2135, 0
    %2162 = vmatpush.msra.mxu0 0.0
    %2163 = vmatpush.msra.mxu0 0.0
    %2164 = vmatpush.msra.mxu0 0.0
    %2165 = vmatpush.msra.mxu0 0.0
    %2166 = vmatpush.msra.mxu0 0.0
    %2167 = vmatpush.msra.mxu0 0.0
    %2168 = vmatpush.msra.mxu0 0.0
    %2169 = vmatpush.msra.mxu0 0.0
    %2170 = vmatpush.msra.mxu0 %v2124
    %2171 = vmatpush.msra.mxu0 %v2123
    %2172 = vmatpush.msra.mxu0 %v2122
    %2173 = vmatpush.msra.mxu0 %v2121
    %2174 = vmatpush.msra.mxu0 %v2120
    %2175 = vmatpush.msra.mxu0 %v2119
    %2176 = vmatpush.msra.mxu0 %v2118
    %2177 = vmatpush.msra.mxu0 %v2117
    %2178 = vmatmul.f32.gmra.mxu0 %v2139
    %v2179 = vpop.f32.mrf.mxu0
    %v2180 = vadd.f32 %v2136, %v2179
    %2181 = vmatmul.f32.gmra.mxu0 %v2142
    %v2182 = vpop.f32.mrf.mxu0
    %v2183 = vadd.f32 %v2136, %v2182
    %2184 = vmatmul.f32.gmra.mxu0 %v2145
    %v2185 = vpop.f32.mrf.mxu0
    %v2186 = vadd.f32 %v2136, %v2185
    %2187 = vmatmul.f32.gmra.mxu0 %v2148
    %v2188 = vpop.f32.mrf.mxu0
    %v2189 = vadd.f32 %v2136, %v2188
    %2190 = vmatmul.f32.gmra.mxu0 %v2151
    %v2191 = vpop.f32.mrf.mxu0
    %v2192 = vadd.f32 %v2136, %v2191
    %2193 = vmatmul.f32.gmra.mxu0 %v2154
    %v2194 = vpop.f32.mrf.mxu0
    %v2195 = vadd.f32 %v2136, %v2194
    %2196 = vmatmul.f32.gmra.mxu0 %v2157
    %v2197 = vpop.f32.mrf.mxu0
    %v2198 = vadd.f32 %v2136, %v2197
    %2199 = vmatmul.f32.gmra.mxu0 %v2160
    %v2200 = vpop.f32.mrf.mxu0
    %v2201 = vadd.f32 %v2136, %v2200
    %2202 = vdwg.mxu0
    %v2203 = vmax.f32 %v2180, 0.0
    %v2204 = vmax.f32 %v2183, 0.0
    %v2205 = vmax.f32 %v2186, 0.0
    %v2206 = vmax.f32 %v2189, 0.0
    %v2207 = vmax.f32 %v2192, 0.0
    %v2208 = vmax.f32 %v2195, 0.0
    %v2209 = vmax.f32 %v2198, 0.0
    %v2210 = vmax.f32 %v2201, 0.0
    %2211 = vmatpush.xpose.msra.mxu0 0.0
    %2212 = vmatpush.xpose.msra.mxu0 0.0
    %2213 = vmatpush.xpose.msra.mxu0 0.0
    %2214 = vmatpush.xpose.msra.mxu0 0.0
    %2215 = vmatpush.xpose.msra.mxu0 0.0
    %2216 = vmatpush.xpose.msra.mxu0 0.0
    %2217 = vmatpush.xpose.msra.mxu0 0.0
    %2218 = vmatpush.xpose.msra.mxu0 0.0
    %2219 = vmatpush.xpose.msra.mxu0 %v2210
    %2220 = vmatpush.xpose.msra.mxu0 %v2209
    %2221 = vmatpush.xpose.msra.mxu0 %v2208
    %2222 = vmatpush.xpose.msra.mxu0 %v2207
    %2223 = vmatpush.xpose.msra.mxu0 %v2206
    %2224 = vmatpush.xpose.msra.mxu0 %v2205
    %2225 = vmatpush.xpose.msra.mxu0 %v2204
    %2226 = vmatpush.xpose.msra.mxu0 %v2203
    %2227 = vmatmul.f32.gmra.mxu0 %v2126
    %v2228 = vpop.f32.mrf.mxu0
    %v2229 = vadd.f32 %v2127, %v2228
    %2230 = vdwg.mxu0
    %vm2231 = vcmask 516096
    %2232 = vst.msk [vmem:[%s2] sm:$0x1] %vm2231, %v2229
    // Predicated region
    $region14: #{wavenet_pallas.1} parent=1 // pred_check
      _
    $region15: #{wavenet_pallas.1} parent=1 // pred_check_branch
      %2234 = sbr.rel (0) target = $region17
    $region16: #{wavenet_pallas.1} parent=1 // pred_region
      _
    $region17: #{wavenet_pallas.1} parent=1 // pred_fallthru
      _
    // Predicated region
    $region18: #{wavenet_pallas.1} parent=1 // pred_check
      _
    $region19: #{wavenet_pallas.1} parent=1 // pred_check_branch
      %2236 = sbr.rel (0) target = $region21
    $region20: #{wavenet_pallas.1} parent=1 // pred_region
      _
    $region21: #{wavenet_pallas.1} parent=1 // pred_fallthru
      _
    %2237 = vsyncpa [#allocation3], 1

</llo_original>
